<compile_context>
chip_gen: v6e
topology: v6e:2x2x1
jax: 0.10.0
libtpu: 0.0.40
codegen_flags: <defaults>
</compile_context>

<pallas_src>
from functools import partial

import jax
import jax.numpy as jnp
from jax.experimental import pallas as pl
from jax.experimental.pallas import tpu as pltpu

# ---- model hyper-parameters (small, consistent with the module) ----
N_EMB = 32                        # n_emb
NUM_HEADS = 4
HEAD_SIZE = N_EMB // NUM_HEADS    # 8
BLOCK_SIZE = 8                    # block_size (= max T); we run with T == BLOCK_SIZE
BATCH = 2


def mha_kernel(x_ref, wqkv_ref, wp_ref, bp_ref, o_ref, *, num_heads):
    """Fused QKV projection, per-head causal attention, and a single fused
    concat + output-projection matmul for a block of `b_blk` batch elements."""
    b_blk, T, C = x_ref.shape
    d = C // num_heads

    wqkv = wqkv_ref[...]                   # (C, 3*C)  columns: [Q heads | K heads | V heads]
    wp = wp_ref[...]                       # (C, C)    (in, out)
    bias = bp_ref[...]                     # (1, C)

    # Causal mask (tril): position t attends only to s <= t
    row = jax.lax.broadcasted_iota(jnp.int32, (T, T), 0)
    col = jax.lax.broadcasted_iota(jnp.int32, (T, T), 1)
    causal = col <= row                    # (T, T)

    # One lane-dense MXU matmul for all batch rows and all of Q/K/V.
    # (The C**0.5 score scale is pre-folded into the Q columns of wqkv.)
    x = x_ref[...].reshape(b_blk * T, C)   # (b_blk*T, C)
    qkv = jnp.dot(x, wqkv, preferred_element_type=jnp.float32)   # (b_blk*T, 3*C)

    # TODO(synk): dropout omitted (identity at inference / p = 0)
    per_batch = []
    for b in range(b_blk):                 # static, unrolled
        r0 = b * T
        q = qkv[r0:r0 + T, 0:C]            # (T, C)  heads packed along columns
        k = qkv[r0:r0 + T, C:2 * C]
        v = qkv[r0:r0 + T, 2 * C:3 * C]

        per_head = []
        for h in range(num_heads):         # static, unrolled
            c0 = h * d
            qh = q[:, c0:c0 + d]           # (T, d)
            kh = k[:, c0:c0 + d]
            vh = v[:, c0:c0 + d]

            # q @ k^T expressed as a contraction on dim 1 of both (trans_b):
            # no explicit transpose -> no XLU relayout per (batch, head).
            s = jax.lax.dot_general(qh, kh, (((1,), (1,)), ((), ())),
                                    preferred_element_type=jnp.float32)  # (T, T)
            s = jnp.where(causal, s, -1e30)

            m = jnp.max(s, axis=-1, keepdims=True)
            e = jnp.exp(s - m)
            p = e / jnp.sum(e, axis=-1, keepdims=True)                   # exact softmax

            oh = jnp.dot(p, vh, preferred_element_type=jnp.float32)      # (T, d)
            per_head.append(oh)

        per_batch.append(jnp.concatenate(per_head, axis=-1))             # (T, C)

    # One fused concat + output projection for the whole block, one bias add,
    # one full-block (lane-dense) store.
    cat = jnp.concatenate(per_batch, axis=0)                             # (b_blk*T, C)
    out = jnp.dot(cat, wp, preferred_element_type=jnp.float32) + bias    # (b_blk*T, C)
    o_ref[...] = out.reshape(b_blk, T, C).astype(o_ref.dtype)


def _num_tensorcores_per_chip():
    """2 on parts with >1 TensorCore per chip (v7x), else 1."""
    try:
        kind = jax.devices()[0].device_kind.lower()
        return 2 if "v7" in kind else 1
    except Exception:
        return 1


def multi_head_attention(x, w_qkv, w_proj, b_proj, *, num_heads, split_batch=None):
    B, T, C = x.shape
    if split_batch is None:
        # Only shard the batch across TensorCores when there is enough per-core
        # work to amortize grid-step overhead and the duplicated weight DMAs.
        split_batch = (_num_tensorcores_per_chip() > 1
                       and B % 2 == 0
                       and B * T * C >= (1 << 16))

    if split_batch:
        # One grid step per TensorCore (not one per batch element).
        b_blk, grid = B // 2, (2,)
    else:
        # Single-TC parts / tiny shapes: one grid step for the whole batch.
        b_blk, grid = B, (1,)

    kernel = partial(mha_kernel, num_heads=num_heads)
    return pl.pallas_call(
        kernel,
        out_shape=jax.ShapeDtypeStruct((B, T, C), x.dtype),
        grid_spec=pltpu.PrefetchScalarGridSpec(
            num_scalar_prefetch=0,
            grid=grid,
            in_specs=[
                pl.BlockSpec((b_blk, T, C), lambda i: (i, 0, 0)),   # x
                pl.BlockSpec((C, 3 * C), lambda i: (0, 0)),         # fused W_qkv (Q pre-scaled)
                pl.BlockSpec((C, C), lambda i: (0, 0)),             # W_proj (in, out)
                pl.BlockSpec((1, C), lambda i: (0, 0)),             # b_proj
            ],
            out_specs=pl.BlockSpec((b_blk, T, C), lambda i: (i, 0, 0)),
        ),
        compiler_params=pltpu.CompilerParams(
            dimension_semantics=("parallel",)),
    )(x, w_qkv, w_proj, b_proj)


def pack_qkv(wq, wk, wv, scale=1.0):
    """Stack per-head (H, C, d) weights into one (C, 3*H*d) matrix, heads contiguous,
    column order [Q | K | V]. The attention score scale is folded into the Q columns
    (one-time host-side weight packing, not activation pre-scaling)."""
    H, C, d = wq.shape

    def flat(w):
        return jnp.transpose(w, (1, 0, 2)).reshape(C, H * d)

    return jnp.concatenate([flat(wq) * scale, flat(wk), flat(wv)], axis=1)


def reference(x, wq, wk, wv, wp, bp):
    """Pure-JAX reference mirroring the PyTorch forward pass."""
    B, T, C = x.shape
    k = jnp.einsum('btc,hcd->bhtd', x, wk)
    q = jnp.einsum('btc,hcd->bhtd', x, wq)
    v = jnp.einsum('btc,hcd->bhtd', x, wv)
    wei = jnp.einsum('bhtd,bhsd->bhts', q, k) * (C ** 0.5)
    mask = jnp.tril(jnp.ones((T, T), bool))
    wei = jnp.where(mask[None, None], wei, -jnp.inf)
    wei = jax.nn.softmax(wei, axis=-1)
    out = jnp.einsum('bhts,bhsd->bhtd', wei, v)
    cat = jnp.transpose(out, (0, 2, 1, 3)).reshape(B, T, C)
    return cat @ wp + bp[0]


if __name__ == "__main__":
    key = jax.random.PRNGKey(0)
    kx, kk, kq, kv, kp, kb = jax.random.split(key, 6)

    B, T, C, H, d = BATCH, BLOCK_SIZE, N_EMB, NUM_HEADS, HEAD_SIZE

    x = jax.random.normal(kx, (B, T, C), dtype=jnp.float32)
    # deterministic "Linear" weights, stored (in, out) per head
    wk = jax.random.normal(kk, (H, C, d), dtype=jnp.float32) * 0.1
    wq = jax.random.normal(kq, (H, C, d), dtype=jnp.float32) * 0.1
    wv = jax.random.normal(kv, (H, C, d), dtype=jnp.float32) * 0.1
    wp = jax.random.normal(kp, (C, C), dtype=jnp.float32) * 0.1
    bp = jax.random.normal(kb, (1, C), dtype=jnp.float32) * 0.1

    # Fused QKV projection weight with the module's C**0.5 score scale folded into Q.
    w_qkv = pack_qkv(wq, wk, wv, scale=float(C) ** 0.5)     # (C, 3*C)

    out = multi_head_attention(x, w_qkv, wp, bp, num_heads=H)
    out = jax.block_until_ready(out)

    ref = reference(x, wq, wk, wv, wp, bp)
    assert out.shape == (B, T, C)
    assert jnp.allclose(out, ref, atol=1e-4, rtol=1e-4), "mismatch vs reference"

    print("KERNEL_OK")
</pallas_src>

<mosaic_0001>
module attributes {stable_mosaic.version = 11 : i64} {
  func.func @mha_kernel(%arg0: i32, %arg1: memref<2x8x32xf32, #tpu.memory_space<vmem>>, %arg2: memref<32x96xf32, #tpu.memory_space<vmem>>, %arg3: memref<32x32xf32, #tpu.memory_space<vmem>>, %arg4: memref<1x32xf32, #tpu.memory_space<vmem>>, %arg5: memref<2x8x32xf32, #tpu.memory_space<vmem>>) attributes {dimension_semantics = [#tpu.dimension_semantics<parallel>], iteration_bounds = array<i64: 1>, scalar_prefetch = 0 : i64, scratch_operands = 0 : i64, tpu.core_type = #tpu.core_type<tc>, window_params = [{transform_indices = @transform_0, window_bounds = array<i64: 2, 8, 32>}, {pipeline_mode = #tpu.pipeline_mode<synchronous>, transform_indices = @transform_1, window_bounds = array<i64: 32, 96>}, {pipeline_mode = #tpu.pipeline_mode<synchronous>, transform_indices = @transform_2, window_bounds = array<i64: 32, 32>}, {pipeline_mode = #tpu.pipeline_mode<synchronous>, transform_indices = @transform_3, window_bounds = array<i64: 1, 32>}, {transform_indices = @transform_4, window_bounds = array<i64: 2, 8, 32>}]} {
    %c0 = arith.constant 0 : index
    %c0_0 = arith.constant 0 : index
    %0 = vector.load %arg2[%c0, %c0_0] : memref<32x96xf32, #tpu.memory_space<vmem>>, vector<32x96xf32>
    %c0_1 = arith.constant 0 : index
    %c0_2 = arith.constant 0 : index
    %1 = vector.load %arg3[%c0_1, %c0_2] : memref<32x32xf32, #tpu.memory_space<vmem>>, vector<32x32xf32>
    %c0_3 = arith.constant 0 : index
    %c0_4 = arith.constant 0 : index
    %2 = vector.load %arg4[%c0_3, %c0_4] : memref<1x32xf32, #tpu.memory_space<vmem>>, vector<1x32xf32>
    %3 = tpu.iota {dimensions = array<i32: 0>} : vector<8x8xi32>
    %4 = tpu.iota {dimensions = array<i32: 1>} : vector<8x8xi32>
    %5 = arith.cmpi sle, %4, %3 : vector<8x8xi32>
    %c0_5 = arith.constant 0 : index
    %c0_6 = arith.constant 0 : index
    %c0_7 = arith.constant 0 : index
    %6 = vector.load %arg1[%c0_5, %c0_6, %c0_7] : memref<2x8x32xf32, #tpu.memory_space<vmem>>, vector<2x8x32xf32>
    %7 = vector.shape_cast %6 : vector<2x8x32xf32> to vector<16x32xf32>
    %cst = arith.constant dense<0.000000e+00> : vector<16x96xf32>
    %8 = tpu.matmul %7, %0, %cst {dimension_numbers = #tpu.dot_dimension_numbers<[1], [0], [0], [1], [0, 0, 1, 1], [], []>} : vector<16x32xf32>, vector<32x96xf32>, vector<16x96xf32> -> vector<16x96xf32>
    %9 = vector.extract_strided_slice %8 {offsets = [0, 0], sizes = [8, 32], strides = [1, 1]} : vector<16x96xf32> to vector<8x32xf32>
    %10 = vector.extract_strided_slice %8 {offsets = [0, 32], sizes = [8, 32], strides = [1, 1]} : vector<16x96xf32> to vector<8x32xf32>
    %11 = vector.extract_strided_slice %8 {offsets = [0, 64], sizes = [8, 32], strides = [1, 1]} : vector<16x96xf32> to vector<8x32xf32>
    %12 = vector.extract_strided_slice %9 {offsets = [0, 0], sizes = [8, 8], strides = [1, 1]} : vector<8x32xf32> to vector<8x8xf32>
    %13 = vector.extract_strided_slice %10 {offsets = [0, 0], sizes = [8, 8], strides = [1, 1]} : vector<8x32xf32> to vector<8x8xf32>
    %14 = vector.extract_strided_slice %11 {offsets = [0, 0], sizes = [8, 8], strides = [1, 1]} : vector<8x32xf32> to vector<8x8xf32>
    %cst_8 = arith.constant dense<0.000000e+00> : vector<8x8xf32>
    %15 = tpu.matmul %12, %13, %cst_8 {dimension_numbers = #tpu.dot_dimension_numbers<[1], [1], [0], [0], [0, 0, 1, 0], [], []>} : vector<8x8xf32>, vector<8x8xf32>, vector<8x8xf32> -> vector<8x8xf32>
    %cst_9 = arith.constant -1.000000e+30 : f32
    %16 = vector.broadcast %cst_9 : f32 to vector<8x8xf32>
    %17 = arith.select %5, %15, %16 : vector<8x8xi1>, vector<8x8xf32>
    %cst_10 = arith.constant dense<0xFF800000> : vector<8xf32>
    %18 = vector.multi_reduction <maximumf>, %17, %cst_10 [1] : vector<8x8xf32> to vector<8xf32>
    %19 = vector.shape_cast %18 : vector<8xf32> to vector<8x1xf32>
    %20 = vector.broadcast %19 : vector<8x1xf32> to vector<8x8xf32>
    %21 = arith.subf %17, %20 : vector<8x8xf32>
    %22 = math.exp %21 : vector<8x8xf32>
    %cst_11 = arith.constant dense<0.000000e+00> : vector<8xf32>
    %23 = vector.multi_reduction <add>, %22, %cst_11 [1] : vector<8x8xf32> to vector<8xf32>
    %24 = vector.shape_cast %23 : vector<8xf32> to vector<8x1xf32>
    %25 = vector.broadcast %24 : vector<8x1xf32> to vector<8x8xf32>
    %26 = arith.divf %22, %25 : vector<8x8xf32>
    %cst_12 = arith.constant dense<0.000000e+00> : vector<8x8xf32>
    %27 = tpu.matmul %26, %14, %cst_12 {dimension_numbers = #tpu.dot_dimension_numbers<[1], [0], [0], [1], [0, 0, 1, 1], [], []>} : vector<8x8xf32>, vector<8x8xf32>, vector<8x8xf32> -> vector<8x8xf32>
    %28 = vector.extract_strided_slice %9 {offsets = [0, 8], sizes = [8, 8], strides = [1, 1]} : vector<8x32xf32> to vector<8x8xf32>
    %29 = vector.extract_strided_slice %10 {offsets = [0, 8], sizes = [8, 8], strides = [1, 1]} : vector<8x32xf32> to vector<8x8xf32>
    %30 = vector.extract_strided_slice %11 {offsets = [0, 8], sizes = [8, 8], strides = [1, 1]} : vector<8x32xf32> to vector<8x8xf32>
    %cst_13 = arith.constant dense<0.000000e+00> : vector<8x8xf32>
    %31 = tpu.matmul %28, %29, %cst_13 {dimension_numbers = #tpu.dot_dimension_numbers<[1], [1], [0], [0], [0, 0, 1, 0], [], []>} : vector<8x8xf32>, vector<8x8xf32>, vector<8x8xf32> -> vector<8x8xf32>
    %cst_14 = arith.constant -1.000000e+30 : f32
    %32 = vector.broadcast %cst_14 : f32 to vector<8x8xf32>
    %33 = arith.select %5, %31, %32 : vector<8x8xi1>, vector<8x8xf32>
    %cst_15 = arith.constant dense<0xFF800000> : vector<8xf32>
    %34 = vector.multi_reduction <maximumf>, %33, %cst_15 [1] : vector<8x8xf32> to vector<8xf32>
    %35 = vector.shape_cast %34 : vector<8xf32> to vector<8x1xf32>
    %36 = vector.broadcast %35 : vector<8x1xf32> to vector<8x8xf32>
    %37 = arith.subf %33, %36 : vector<8x8xf32>
    %38 = math.exp %37 : vector<8x8xf32>
    %cst_16 = arith.constant dense<0.000000e+00> : vector<8xf32>
    %39 = vector.multi_reduction <add>, %38, %cst_16 [1] : vector<8x8xf32> to vector<8xf32>
    %40 = vector.shape_cast %39 : vector<8xf32> to vector<8x1xf32>
    %41 = vector.broadcast %40 : vector<8x1xf32> to vector<8x8xf32>
    %42 = arith.divf %38, %41 : vector<8x8xf32>
    %cst_17 = arith.constant dense<0.000000e+00> : vector<8x8xf32>
    %43 = tpu.matmul %42, %30, %cst_17 {dimension_numbers = #tpu.dot_dimension_numbers<[1], [0], [0], [1], [0, 0, 1, 1], [], []>} : vector<8x8xf32>, vector<8x8xf32>, vector<8x8xf32> -> vector<8x8xf32>
    %44 = vector.extract_strided_slice %9 {offsets = [0, 16], sizes = [8, 8], strides = [1, 1]} : vector<8x32xf32> to vector<8x8xf32>
    %45 = vector.extract_strided_slice %10 {offsets = [0, 16], sizes = [8, 8], strides = [1, 1]} : vector<8x32xf32> to vector<8x8xf32>
    %46 = vector.extract_strided_slice %11 {offsets = [0, 16], sizes = [8, 8], strides = [1, 1]} : vector<8x32xf32> to vector<8x8xf32>
    %cst_18 = arith.constant dense<0.000000e+00> : vector<8x8xf32>
    %47 = tpu.matmul %44, %45, %cst_18 {dimension_numbers = #tpu.dot_dimension_numbers<[1], [1], [0], [0], [0, 0, 1, 0], [], []>} : vector<8x8xf32>, vector<8x8xf32>, vector<8x8xf32> -> vector<8x8xf32>
    %cst_19 = arith.constant -1.000000e+30 : f32
    %48 = vector.broadcast %cst_19 : f32 to vector<8x8xf32>
    %49 = arith.select %5, %47, %48 : vector<8x8xi1>, vector<8x8xf32>
    %cst_20 = arith.constant dense<0xFF800000> : vector<8xf32>
    %50 = vector.multi_reduction <maximumf>, %49, %cst_20 [1] : vector<8x8xf32> to vector<8xf32>
    %51 = vector.shape_cast %50 : vector<8xf32> to vector<8x1xf32>
    %52 = vector.broadcast %51 : vector<8x1xf32> to vector<8x8xf32>
    %53 = arith.subf %49, %52 : vector<8x8xf32>
    %54 = math.exp %53 : vector<8x8xf32>
    %cst_21 = arith.constant dense<0.000000e+00> : vector<8xf32>
    %55 = vector.multi_reduction <add>, %54, %cst_21 [1] : vector<8x8xf32> to vector<8xf32>
    %56 = vector.shape_cast %55 : vector<8xf32> to vector<8x1xf32>
    %57 = vector.broadcast %56 : vector<8x1xf32> to vector<8x8xf32>
    %58 = arith.divf %54, %57 : vector<8x8xf32>
    %cst_22 = arith.constant dense<0.000000e+00> : vector<8x8xf32>
    %59 = tpu.matmul %58, %46, %cst_22 {dimension_numbers = #tpu.dot_dimension_numbers<[1], [0], [0], [1], [0, 0, 1, 1], [], []>} : vector<8x8xf32>, vector<8x8xf32>, vector<8x8xf32> -> vector<8x8xf32>
    %60 = vector.extract_strided_slice %9 {offsets = [0, 24], sizes = [8, 8], strides = [1, 1]} : vector<8x32xf32> to vector<8x8xf32>
    %61 = vector.extract_strided_slice %10 {offsets = [0, 24], sizes = [8, 8], strides = [1, 1]} : vector<8x32xf32> to vector<8x8xf32>
    %62 = vector.extract_strided_slice %11 {offsets = [0, 24], sizes = [8, 8], strides = [1, 1]} : vector<8x32xf32> to vector<8x8xf32>
    %cst_23 = arith.constant dense<0.000000e+00> : vector<8x8xf32>
    %63 = tpu.matmul %60, %61, %cst_23 {dimension_numbers = #tpu.dot_dimension_numbers<[1], [1], [0], [0], [0, 0, 1, 0], [], []>} : vector<8x8xf32>, vector<8x8xf32>, vector<8x8xf32> -> vector<8x8xf32>
    %cst_24 = arith.constant -1.000000e+30 : f32
    %64 = vector.broadcast %cst_24 : f32 to vector<8x8xf32>
    %65 = arith.select %5, %63, %64 : vector<8x8xi1>, vector<8x8xf32>
    %cst_25 = arith.constant dense<0xFF800000> : vector<8xf32>
    %66 = vector.multi_reduction <maximumf>, %65, %cst_25 [1] : vector<8x8xf32> to vector<8xf32>
    %67 = vector.shape_cast %66 : vector<8xf32> to vector<8x1xf32>
    %68 = vector.broadcast %67 : vector<8x1xf32> to vector<8x8xf32>
    %69 = arith.subf %65, %68 : vector<8x8xf32>
    %70 = math.exp %69 : vector<8x8xf32>
    %cst_26 = arith.constant dense<0.000000e+00> : vector<8xf32>
    %71 = vector.multi_reduction <add>, %70, %cst_26 [1] : vector<8x8xf32> to vector<8xf32>
    %72 = vector.shape_cast %71 : vector<8xf32> to vector<8x1xf32>
    %73 = vector.broadcast %72 : vector<8x1xf32> to vector<8x8xf32>
    %74 = arith.divf %70, %73 : vector<8x8xf32>
    %cst_27 = arith.constant dense<0.000000e+00> : vector<8x8xf32>
    %75 = tpu.matmul %74, %62, %cst_27 {dimension_numbers = #tpu.dot_dimension_numbers<[1], [0], [0], [1], [0, 0, 1, 1], [], []>} : vector<8x8xf32>, vector<8x8xf32>, vector<8x8xf32> -> vector<8x8xf32>
    %76 = tpu.concatenate %27, %43, %59, %75 in 1 : vector<8x8xf32>, vector<8x8xf32>, vector<8x8xf32>, vector<8x8xf32> -> vector<8x32xf32>
    %77 = vector.extract_strided_slice %8 {offsets = [8, 0], sizes = [8, 32], strides = [1, 1]} : vector<16x96xf32> to vector<8x32xf32>
    %78 = vector.extract_strided_slice %8 {offsets = [8, 32], sizes = [8, 32], strides = [1, 1]} : vector<16x96xf32> to vector<8x32xf32>
    %79 = vector.extract_strided_slice %8 {offsets = [8, 64], sizes = [8, 32], strides = [1, 1]} : vector<16x96xf32> to vector<8x32xf32>
    %80 = vector.extract_strided_slice %77 {offsets = [0, 0], sizes = [8, 8], strides = [1, 1]} : vector<8x32xf32> to vector<8x8xf32>
    %81 = vector.extract_strided_slice %78 {offsets = [0, 0], sizes = [8, 8], strides = [1, 1]} : vector<8x32xf32> to vector<8x8xf32>
    %82 = vector.extract_strided_slice %79 {offsets = [0, 0], sizes = [8, 8], strides = [1, 1]} : vector<8x32xf32> to vector<8x8xf32>
    %cst_28 = arith.constant dense<0.000000e+00> : vector<8x8xf32>
    %83 = tpu.matmul %80, %81, %cst_28 {dimension_numbers = #tpu.dot_dimension_numbers<[1], [1], [0], [0], [0, 0, 1, 0], [], []>} : vector<8x8xf32>, vector<8x8xf32>, vector<8x8xf32> -> vector<8x8xf32>
    %cst_29 = arith.constant -1.000000e+30 : f32
    %84 = vector.broadcast %cst_29 : f32 to vector<8x8xf32>
    %85 = arith.select %5, %83, %84 : vector<8x8xi1>, vector<8x8xf32>
    %cst_30 = arith.constant dense<0xFF800000> : vector<8xf32>
    %86 = vector.multi_reduction <maximumf>, %85, %cst_30 [1] : vector<8x8xf32> to vector<8xf32>
    %87 = vector.shape_cast %86 : vector<8xf32> to vector<8x1xf32>
    %88 = vector.broadcast %87 : vector<8x1xf32> to vector<8x8xf32>
    %89 = arith.subf %85, %88 : vector<8x8xf32>
    %90 = math.exp %89 : vector<8x8xf32>
    %cst_31 = arith.constant dense<0.000000e+00> : vector<8xf32>
    %91 = vector.multi_reduction <add>, %90, %cst_31 [1] : vector<8x8xf32> to vector<8xf32>
    %92 = vector.shape_cast %91 : vector<8xf32> to vector<8x1xf32>
    %93 = vector.broadcast %92 : vector<8x1xf32> to vector<8x8xf32>
    %94 = arith.divf %90, %93 : vector<8x8xf32>
    %cst_32 = arith.constant dense<0.000000e+00> : vector<8x8xf32>
    %95 = tpu.matmul %94, %82, %cst_32 {dimension_numbers = #tpu.dot_dimension_numbers<[1], [0], [0], [1], [0, 0, 1, 1], [], []>} : vector<8x8xf32>, vector<8x8xf32>, vector<8x8xf32> -> vector<8x8xf32>
    %96 = vector.extract_strided_slice %77 {offsets = [0, 8], sizes = [8, 8], strides = [1, 1]} : vector<8x32xf32> to vector<8x8xf32>
    %97 = vector.extract_strided_slice %78 {offsets = [0, 8], sizes = [8, 8], strides = [1, 1]} : vector<8x32xf32> to vector<8x8xf32>
    %98 = vector.extract_strided_slice %79 {offsets = [0, 8], sizes = [8, 8], strides = [1, 1]} : vector<8x32xf32> to vector<8x8xf32>
    %cst_33 = arith.constant dense<0.000000e+00> : vector<8x8xf32>
    %99 = tpu.matmul %96, %97, %cst_33 {dimension_numbers = #tpu.dot_dimension_numbers<[1], [1], [0], [0], [0, 0, 1, 0], [], []>} : vector<8x8xf32>, vector<8x8xf32>, vector<8x8xf32> -> vector<8x8xf32>
    %cst_34 = arith.constant -1.000000e+30 : f32
    %100 = vector.broadcast %cst_34 : f32 to vector<8x8xf32>
    %101 = arith.select %5, %99, %100 : vector<8x8xi1>, vector<8x8xf32>
    %cst_35 = arith.constant dense<0xFF800000> : vector<8xf32>
    %102 = vector.multi_reduction <maximumf>, %101, %cst_35 [1] : vector<8x8xf32> to vector<8xf32>
    %103 = vector.shape_cast %102 : vector<8xf32> to vector<8x1xf32>
    %104 = vector.broadcast %103 : vector<8x1xf32> to vector<8x8xf32>
    %105 = arith.subf %101, %104 : vector<8x8xf32>
    %106 = math.exp %105 : vector<8x8xf32>
    %cst_36 = arith.constant dense<0.000000e+00> : vector<8xf32>
    %107 = vector.multi_reduction <add>, %106, %cst_36 [1] : vector<8x8xf32> to vector<8xf32>
    %108 = vector.shape_cast %107 : vector<8xf32> to vector<8x1xf32>
    %109 = vector.broadcast %108 : vector<8x1xf32> to vector<8x8xf32>
    %110 = arith.divf %106, %109 : vector<8x8xf32>
    %cst_37 = arith.constant dense<0.000000e+00> : vector<8x8xf32>
    %111 = tpu.matmul %110, %98, %cst_37 {dimension_numbers = #tpu.dot_dimension_numbers<[1], [0], [0], [1], [0, 0, 1, 1], [], []>} : vector<8x8xf32>, vector<8x8xf32>, vector<8x8xf32> -> vector<8x8xf32>
    %112 = vector.extract_strided_slice %77 {offsets = [0, 16], sizes = [8, 8], strides = [1, 1]} : vector<8x32xf32> to vector<8x8xf32>
    %113 = vector.extract_strided_slice %78 {offsets = [0, 16], sizes = [8, 8], strides = [1, 1]} : vector<8x32xf32> to vector<8x8xf32>
    %114 = vector.extract_strided_slice %79 {offsets = [0, 16], sizes = [8, 8], strides = [1, 1]} : vector<8x32xf32> to vector<8x8xf32>
    %cst_38 = arith.constant dense<0.000000e+00> : vector<8x8xf32>
    %115 = tpu.matmul %112, %113, %cst_38 {dimension_numbers = #tpu.dot_dimension_numbers<[1], [1], [0], [0], [0, 0, 1, 0], [], []>} : vector<8x8xf32>, vector<8x8xf32>, vector<8x8xf32> -> vector<8x8xf32>
    %cst_39 = arith.constant -1.000000e+30 : f32
    %116 = vector.broadcast %cst_39 : f32 to vector<8x8xf32>
    %117 = arith.select %5, %115, %116 : vector<8x8xi1>, vector<8x8xf32>
    %cst_40 = arith.constant dense<0xFF800000> : vector<8xf32>
    %118 = vector.multi_reduction <maximumf>, %117, %cst_40 [1] : vector<8x8xf32> to vector<8xf32>
    %119 = vector.shape_cast %118 : vector<8xf32> to vector<8x1xf32>
    %120 = vector.broadcast %119 : vector<8x1xf32> to vector<8x8xf32>
    %121 = arith.subf %117, %120 : vector<8x8xf32>
    %122 = math.exp %121 : vector<8x8xf32>
    %cst_41 = arith.constant dense<0.000000e+00> : vector<8xf32>
    %123 = vector.multi_reduction <add>, %122, %cst_41 [1] : vector<8x8xf32> to vector<8xf32>
    %124 = vector.shape_cast %123 : vector<8xf32> to vector<8x1xf32>
    %125 = vector.broadcast %124 : vector<8x1xf32> to vector<8x8xf32>
    %126 = arith.divf %122, %125 : vector<8x8xf32>
    %cst_42 = arith.constant dense<0.000000e+00> : vector<8x8xf32>
    %127 = tpu.matmul %126, %114, %cst_42 {dimension_numbers = #tpu.dot_dimension_numbers<[1], [0], [0], [1], [0, 0, 1, 1], [], []>} : vector<8x8xf32>, vector<8x8xf32>, vector<8x8xf32> -> vector<8x8xf32>
    %128 = vector.extract_strided_slice %77 {offsets = [0, 24], sizes = [8, 8], strides = [1, 1]} : vector<8x32xf32> to vector<8x8xf32>
    %129 = vector.extract_strided_slice %78 {offsets = [0, 24], sizes = [8, 8], strides = [1, 1]} : vector<8x32xf32> to vector<8x8xf32>
    %130 = vector.extract_strided_slice %79 {offsets = [0, 24], sizes = [8, 8], strides = [1, 1]} : vector<8x32xf32> to vector<8x8xf32>
    %cst_43 = arith.constant dense<0.000000e+00> : vector<8x8xf32>
    %131 = tpu.matmul %128, %129, %cst_43 {dimension_numbers = #tpu.dot_dimension_numbers<[1], [1], [0], [0], [0, 0, 1, 0], [], []>} : vector<8x8xf32>, vector<8x8xf32>, vector<8x8xf32> -> vector<8x8xf32>
    %cst_44 = arith.constant -1.000000e+30 : f32
    %132 = vector.broadcast %cst_44 : f32 to vector<8x8xf32>
    %133 = arith.select %5, %131, %132 : vector<8x8xi1>, vector<8x8xf32>
    %cst_45 = arith.constant dense<0xFF800000> : vector<8xf32>
    %134 = vector.multi_reduction <maximumf>, %133, %cst_45 [1] : vector<8x8xf32> to vector<8xf32>
    %135 = vector.shape_cast %134 : vector<8xf32> to vector<8x1xf32>
    %136 = vector.broadcast %135 : vector<8x1xf32> to vector<8x8xf32>
    %137 = arith.subf %133, %136 : vector<8x8xf32>
    %138 = math.exp %137 : vector<8x8xf32>
    %cst_46 = arith.constant dense<0.000000e+00> : vector<8xf32>
    %139 = vector.multi_reduction <add>, %138, %cst_46 [1] : vector<8x8xf32> to vector<8xf32>
    %140 = vector.shape_cast %139 : vector<8xf32> to vector<8x1xf32>
    %141 = vector.broadcast %140 : vector<8x1xf32> to vector<8x8xf32>
    %142 = arith.divf %138, %141 : vector<8x8xf32>
    %cst_47 = arith.constant dense<0.000000e+00> : vector<8x8xf32>
    %143 = tpu.matmul %142, %130, %cst_47 {dimension_numbers = #tpu.dot_dimension_numbers<[1], [0], [0], [1], [0, 0, 1, 1], [], []>} : vector<8x8xf32>, vector<8x8xf32>, vector<8x8xf32> -> vector<8x8xf32>
    %144 = tpu.concatenate %95, %111, %127, %143 in 1 : vector<8x8xf32>, vector<8x8xf32>, vector<8x8xf32>, vector<8x8xf32> -> vector<8x32xf32>
    %145 = tpu.concatenate %76, %144 in 0 : vector<8x32xf32>, vector<8x32xf32> -> vector<16x32xf32>
    %cst_48 = arith.constant dense<0.000000e+00> : vector<16x32xf32>
    %146 = tpu.matmul %145, %1, %cst_48 {dimension_numbers = #tpu.dot_dimension_numbers<[1], [0], [0], [1], [0, 0, 1, 1], [], []>} : vector<16x32xf32>, vector<32x32xf32>, vector<16x32xf32> -> vector<16x32xf32>
    %147 = vector.broadcast %2 : vector<1x32xf32> to vector<16x32xf32>
    %148 = arith.addf %146, %147 : vector<16x32xf32>
    %149 = vector.shape_cast %148 : vector<16x32xf32> to vector<2x8x32xf32>
    %c0_49 = arith.constant 0 : index
    %c0_50 = arith.constant 0 : index
    %c0_51 = arith.constant 0 : index
    %150 = vector.load %arg5[%c0_49, %c0_50, %c0_51] : memref<2x8x32xf32, #tpu.memory_space<vmem>>, vector<2x8x32xf32>
    tpu.vector_store %arg5[%c0_49, %c0_50, %c0_51], %149 {strides = array<i32>} : memref<2x8x32xf32, #tpu.memory_space<vmem>>, vector<2x8x32xf32>,
    return
  }
  func.func @transform_0(%arg0: i32) -> (i32, i32, i32) {
    %c0_i32 = arith.constant 0 : i32
    %c0_i32_0 = arith.constant 0 : i32
    %c0_i32_1 = arith.constant 0 : i32
    return %arg0, %c0_i32, %c0_i32_0 : i32, i32, i32
  }
  func.func @transform_1(%arg0: i32) -> (i32, i32) {
    %c0_i32 = arith.constant 0 : i32
    %c0_i32_0 = arith.constant 0 : i32
    %c0_i32_1 = arith.constant 0 : i32
    return %c0_i32, %c0_i32_0 : i32, i32
  }
  func.func @transform_2(%arg0: i32) -> (i32, i32) {
    %c0_i32 = arith.constant 0 : i32
    %c0_i32_0 = arith.constant 0 : i32
    %c0_i32_1 = arith.constant 0 : i32
    return %c0_i32, %c0_i32_0 : i32, i32
  }
  func.func @transform_3(%arg0: i32) -> (i32, i32) {
    %c0_i32 = arith.constant 0 : i32
    %c0_i32_0 = arith.constant 0 : i32
    %c0_i32_1 = arith.constant 0 : i32
    return %c0_i32, %c0_i32_0 : i32, i32
  }
  func.func @transform_4(%arg0: i32) -> (i32, i32, i32) {
    %c0_i32 = arith.constant 0 : i32
    %c0_i32_0 = arith.constant 0 : i32
    %c0_i32_1 = arith.constant 0 : i32
    return %arg0, %c0_i32, %c0_i32_0 : i32, i32, i32
  }
}

</mosaic_0001>

<llo_original>
// kernel: tpu_custom_call.1
$region0: #{tpu_custom_call.1}
  #allocation0 [shape = 'u32[]', space=smem, size = 0x4, offset = 0x4, fixed_abs, tag = 'smem constant byte address 0x4 - core index']
  #allocation1 [shape = 'u32[144,128]{1,0:T(1,128)}', space=vmem, size = 0x12000, scoped, tag = 'internal scratch']
  %s0 = inlined_call_operand.hbm [shape: f32[2,8,32], index: 0, kind: input, shape index: {}]
  %s1 = inlined_call_operand.hbm [shape: f32[32,96], index: 1, kind: input, shape index: {}]
  %s2 = inlined_call_operand.hbm [shape: f32[32,32], index: 2, kind: input, shape index: {}]
  %s3 = inlined_call_operand.vmem [shape: f32[1,32], index: 3, kind: input, shape index: {}]
  %s4 = inlined_call_operand.hbm [shape: f32[2,8,32], index: 4, kind: output, shape index: {}]
  %s5 = sld [smem:[#allocation0]]
  $region38: #{tpu_custom_call.1} parent=0
    _
  %s7 = ssub.s32 1, %s5
  %s8 = scalar_select 0, %s7, %s5
  $region1: #{tpu_custom_call.1} parent=0
    #allocation2 [shape = 'u8[8192]{0}', space=vmem, size = 0x2000, scoped, tag = 'input window, operand 0, single buffered']
    #allocation3 [shape = 's32[1]{0}', space=sflag, size = 0x4, scoped, tag = 'scoped memory for tpu_custom_call.1']
    #allocation4 [shape = 's32[1]{0}', space=sflag, size = 0x4, scoped, tag = 'scoped memory for tpu_custom_call.1']
    #allocation5 [shape = 'u8[16384]{0}', space=vmem, size = 0x4000, scoped, tag = 'input window, operand 1, single buffered']
    #allocation6 [shape = 's32[1]{0}', space=sflag, size = 0x4, scoped, tag = 'scoped memory for tpu_custom_call.1']
    #allocation7 [shape = 'u8[16384]{0}', space=vmem, size = 0x4000, scoped, tag = 'input window, operand 2, single buffered']
    #allocation8 [shape = 'u8[8192]{0}', space=vmem, size = 0x2000, scoped, tag = 'output window, operand 0, single buffered']
    %9 = vsyncpa [#allocation3], 0
    %10 = vsyncpa [#allocation6], 0
    %11 = vsyncpa [#allocation4], 0
    // Predicated region
    $region2: #{tpu_custom_call.1} parent=1 // pred_check
      _
    $region3: #{tpu_custom_call.1} parent=1 // pred_check_branch
      %13 = sbr.rel (0) target = $region5
    $region4: #{tpu_custom_call.1} parent=1 // pred_region
      %s15 = ssub.s32 256, 256
      %16 = vsyncadd [#allocation3], %s15
      %s17 = sshll.u32 [#allocation2], 4
      %s18 = int_to_ptr.vmem [resolvable:$true] %s17
      %23 = dma.hbm_to_vmem [thread:$0]  %s0, 256, %s18, [#allocation3], 128, 128, 8
    $region5: #{tpu_custom_call.1} parent=1 // pred_fallthru
      _
    // Predicated region
    $region6: #{tpu_custom_call.1} parent=1 // pred_check
      _
    $region7: #{tpu_custom_call.1} parent=1 // pred_check_branch
      %25 = sbr.rel (0) target = $region9
    $region8: #{tpu_custom_call.1} parent=1 // pred_region
      %s27 = ssub.s32 512, 512
      %28 = vsyncadd [#allocation6], %s27
      %s29 = sshll.u32 [#allocation5], 4
      %s30 = int_to_ptr.vmem [resolvable:$true] %s29
      %35 = dma.hbm_to_vmem [thread:$0]  %s1, 512, %s30, [#allocation6], 128, 128, 8
    $region9: #{tpu_custom_call.1} parent=1 // pred_fallthru
      _
    // Predicated region
    $region10: #{tpu_custom_call.1} parent=1 // pred_check
      _
    $region11: #{tpu_custom_call.1} parent=1 // pred_check_branch
      %37 = sbr.rel (0) target = $region13
    $region12: #{tpu_custom_call.1} parent=1 // pred_region
      %s39 = ssub.s32 512, 512
      %40 = vsyncadd [#allocation6], %s39
      %s41 = sshll.u32 [#allocation7], 4
      %s42 = int_to_ptr.vmem [resolvable:$true] %s41
      %47 = dma.hbm_to_vmem [thread:$0]  %s2, 512, %s42, [#allocation6], 128, 128, 8
    $region13: #{tpu_custom_call.1} parent=1 // pred_fallthru
      _
    // Predicated region
    $region14: #{tpu_custom_call.1} parent=1 // pred_check
      _
    $region15: #{tpu_custom_call.1} parent=1 // pred_check_branch
      %49 = sbr.rel (0) target = $region17
    $region16: #{tpu_custom_call.1} parent=1 // pred_region
      _
    $region17: #{tpu_custom_call.1} parent=1 // pred_fallthru
      _
    // Predicated region
    $region18: #{tpu_custom_call.1} parent=1 // pred_check
      _
    $region19: #{tpu_custom_call.1} parent=1 // pred_check_branch
      %51 = sbr.rel (0) target = $region21
    $region20: #{tpu_custom_call.1} parent=1 // pred_region
      %52 = dma.done [#allocation3], 256
    $region21: #{tpu_custom_call.1} parent=1 // pred_fallthru
      _
    // Predicated region
    $region22: #{tpu_custom_call.1} parent=1 // pred_check
      _
    $region23: #{tpu_custom_call.1} parent=1 // pred_check_branch
      %54 = sbr.rel (0) target = $region25
    $region24: #{tpu_custom_call.1} parent=1 // pred_region
      %55 = dma.done [#allocation6], 512
    $region25: #{tpu_custom_call.1} parent=1 // pred_fallthru
      _
    // Predicated region
    $region26: #{tpu_custom_call.1} parent=1 // pred_check
      _
    $region27: #{tpu_custom_call.1} parent=1 // pred_check_branch
      %57 = sbr.rel (0) target = $region29
    $region28: #{tpu_custom_call.1} parent=1 // pred_region
      %58 = dma.done [#allocation6], 512
    $region29: #{tpu_custom_call.1} parent=1 // pred_fallthru
      _
    %v59 = vld [vmem:[#allocation5] sm:$0xff]
    %v60 = vld [vmem:[#allocation5 + $0x8] sm:$0xff]
    %v61 = vld [vmem:[#allocation5 + $0x10] sm:$0xff]
    %v62 = vld [vmem:[#allocation5 + $0x18] sm:$0xff]
    %v63 = vld [vmem:[#allocation7] sm:$0xff]
    %v64 = vld [vmem:[#allocation7 + $0x8] sm:$0xff]
    %v65 = vld [vmem:[#allocation7 + $0x10] sm:$0xff]
    %v66 = vld [vmem:[#allocation7 + $0x18] sm:$0xff]
    %v67 = vld [vmem:[%s3] sm:$0x1]
    %v68 = vlaneseq
    %v69 = vshrl.u32 %v68, 7
    %v70 = vlaneseq
    %v71 = vand.u32 %v70, 127
    %vm72 = vcmp.le.s32.totalorder %v71, %v69
    %v73 = vld [vmem:[#allocation2] sm:$0xff]
    %v74 = vld [vmem:[#allocation2 + $0x8] sm:$0xff]
    %vm75 = vcmask 261120
    %v77 = vsel %vm75, %v73, 0
    %v80 = vsel %vm75, %v74, 0
    %82 = vmatprep.subr.mxu0 0.0
    %83 = vmatpush1.msra.mxu0 0.0
    %84 = vmatprep.subr.mxu0 0.0
    %85 = vmatpush1.msra.mxu0 0.0
    %86 = vmatprep.subr.mxu0 0.0
    %87 = vmatpush1.msra.mxu0 0.0
    %88 = vmatprep.subr.mxu0 0.0
    %89 = vmatpush1.msra.mxu0 0.0
    %90 = vmatprep.subr.mxu0 0.0
    %91 = vmatpush1.msra.mxu0 0.0
    %92 = vmatprep.subr.mxu0 0.0
    %93 = vmatpush1.msra.mxu0 0.0
    %94 = vmatprep.subr.mxu0 0.0
    %95 = vmatpush1.msra.mxu0 0.0
    %96 = vmatprep.subr.mxu0 0.0
    %97 = vmatpush1.msra.mxu0 0.0
    %98 = vmatprep.subr.mxu0 0.0
    %99 = vmatpush1.msra.mxu0 0.0
    %100 = vmatprep.subr.mxu0 0.0
    %101 = vmatpush1.msra.mxu0 0.0
    %102 = vmatprep.subr.mxu0 0.0
    %103 = vmatpush1.msra.mxu0 0.0
    %104 = vmatprep.subr.mxu0 0.0
    %105 = vmatpush1.msra.mxu0 0.0
    %106 = vmatprep.subr.mxu0 0.0
    %107 = vmatpush1.msra.mxu0 %v62
    %108 = vmatprep.subr.mxu0 0.0
    %109 = vmatpush1.msra.mxu0 %v61
    %110 = vmatprep.subr.mxu0 0.0
    %111 = vmatpush1.msra.mxu0 %v60
    %112 = vmatprep.subr.mxu0 0.0
    %113 = vmatpush1.msra.mxu0 %v59
    %114 = vmatprep.subr.mxu0 0.0
    %115 = vmatpush2.msra.mxu0 0.0
    %116 = vmatprep.subr.mxu0 0.0
    %117 = vmatpush2.msra.mxu0 0.0
    %118 = vmatprep.subr.mxu0 0.0
    %119 = vmatpush2.msra.mxu0 0.0
    %120 = vmatprep.subr.mxu0 0.0
    %121 = vmatpush2.msra.mxu0 0.0
    %122 = vmatprep.subr.mxu0 0.0
    %123 = vmatpush2.msra.mxu0 0.0
    %124 = vmatprep.subr.mxu0 0.0
    %125 = vmatpush2.msra.mxu0 0.0
    %126 = vmatprep.subr.mxu0 0.0
    %127 = vmatpush2.msra.mxu0 0.0
    %128 = vmatprep.subr.mxu0 0.0
    %129 = vmatpush2.msra.mxu0 0.0
    %130 = vmatprep.subr.mxu0 0.0
    %131 = vmatpush2.msra.mxu0 0.0
    %132 = vmatprep.subr.mxu0 0.0
    %133 = vmatpush2.msra.mxu0 0.0
    %134 = vmatprep.subr.mxu0 0.0
    %135 = vmatpush2.msra.mxu0 0.0
    %136 = vmatprep.subr.mxu0 0.0
    %137 = vmatpush2.msra.mxu0 0.0
    %138 = vmatprep.subr.mxu0 0.0
    %139 = vmatpush2.msra.mxu0 0.0
    %140 = vmatprep.subr.mxu0 0.0
    %141 = vmatpush2.msra.mxu0 0.0
    %142 = vmatprep.subr.mxu0 0.0
    %143 = vmatpush2.msra.mxu0 0.0
    %144 = vmatprep.subr.mxu0 0.0
    %145 = vmatpush2.msra.mxu0 0.0
    %146 = vmatprep.mubr.f32.mxu0 0.0
    %147 = vmatmul.mubr.f32.gmra.mxu0 %v77
    %v148 = vpop.f32.mrf.mxu0
    %v149 = vadd.f32 0.0, %v148
    %v150 = vpop.f32.mrf.mxu0
    %151 = vmatprep.mubr.f32.mxu0 0.0
    %152 = vmatmul.mubr.f32.gmra.mxu0 %v80
    %v153 = vpop.f32.mrf.mxu0
    %v154 = vadd.f32 0.0, %v153
    %v155 = vpop.f32.mrf.mxu0
    %156 = vdwg.mxu0
    %158 = vrot.lane.b32.xlu0 %v149, 96
    %v159 = vpop.permute.xlu0 %158
    %vm160 = vcmask 64512
    %v161 = vsel %vm160, %v149, 0
    %v163 = vsel %vm160, %v159, 0
    %165 = vmatprep.subr.mxu0 0.0
    %166 = vmatpush1.xpose.msra.mxu0 0.0
    %167 = vmatprep.subr.mxu0 0.0
    %168 = vmatpush1.xpose.msra.mxu0 0.0
    %169 = vmatprep.subr.mxu0 0.0
    %170 = vmatpush1.xpose.msra.mxu0 0.0
    %171 = vmatprep.subr.mxu0 0.0
    %172 = vmatpush1.xpose.msra.mxu0 0.0
    %173 = vmatprep.subr.mxu0 0.0
    %174 = vmatpush1.xpose.msra.mxu0 0.0
    %175 = vmatprep.subr.mxu0 0.0
    %176 = vmatpush1.xpose.msra.mxu0 0.0
    %177 = vmatprep.subr.mxu0 0.0
    %178 = vmatpush1.xpose.msra.mxu0 0.0
    %179 = vmatprep.subr.mxu0 0.0
    %180 = vmatpush1.xpose.msra.mxu0 0.0
    %181 = vmatprep.subr.mxu0 0.0
    %182 = vmatpush1.xpose.msra.mxu0 0.0
    %183 = vmatprep.subr.mxu0 0.0
    %184 = vmatpush1.xpose.msra.mxu0 0.0
    %185 = vmatprep.subr.mxu0 0.0
    %186 = vmatpush1.xpose.msra.mxu0 0.0
    %187 = vmatprep.subr.mxu0 0.0
    %188 = vmatpush1.xpose.msra.mxu0 0.0
    %189 = vmatprep.subr.mxu0 0.0
    %190 = vmatpush1.xpose.msra.mxu0 0.0
    %191 = vmatprep.subr.mxu0 0.0
    %192 = vmatpush1.xpose.msra.mxu0 0.0
    %193 = vmatprep.subr.mxu0 0.0
    %194 = vmatpush1.xpose.msra.mxu0 0.0
    %195 = vmatprep.subr.mxu0 0.0
    %196 = vmatpush1.xpose.msra.mxu0 %v163
    %197 = vmatprep.subr.mxu0 0.0
    %198 = vmatpush2.xpose.msra.mxu0 0.0
    %199 = vmatprep.subr.mxu0 0.0
    %200 = vmatpush2.xpose.msra.mxu0 0.0
    %201 = vmatprep.subr.mxu0 0.0
    %202 = vmatpush2.xpose.msra.mxu0 0.0
    %203 = vmatprep.subr.mxu0 0.0
    %204 = vmatpush2.xpose.msra.mxu0 0.0
    %205 = vmatprep.subr.mxu0 0.0
    %206 = vmatpush2.xpose.msra.mxu0 0.0
    %207 = vmatprep.subr.mxu0 0.0
    %208 = vmatpush2.xpose.msra.mxu0 0.0
    %209 = vmatprep.subr.mxu0 0.0
    %210 = vmatpush2.xpose.msra.mxu0 0.0
    %211 = vmatprep.subr.mxu0 0.0
    %212 = vmatpush2.xpose.msra.mxu0 0.0
    %213 = vmatprep.subr.mxu0 0.0
    %214 = vmatpush2.xpose.msra.mxu0 0.0
    %215 = vmatprep.subr.mxu0 0.0
    %216 = vmatpush2.xpose.msra.mxu0 0.0
    %217 = vmatprep.subr.mxu0 0.0
    %218 = vmatpush2.xpose.msra.mxu0 0.0
    %219 = vmatprep.subr.mxu0 0.0
    %220 = vmatpush2.xpose.msra.mxu0 0.0
    %221 = vmatprep.subr.mxu0 0.0
    %222 = vmatpush2.xpose.msra.mxu0 0.0
    %223 = vmatprep.subr.mxu0 0.0
    %224 = vmatpush2.xpose.msra.mxu0 0.0
    %225 = vmatprep.subr.mxu0 0.0
    %226 = vmatpush2.xpose.msra.mxu0 0.0
    %227 = vmatprep.subr.mxu0 0.0
    %228 = vmatpush2.xpose.msra.mxu0 0.0
    %229 = vmatprep.mubr.f32.mxu0 0.0
    %230 = vmatmul.mubr.f32.gmra.mxu0 %v161
    %v231 = vpop.f32.mrf.mxu0
    %v232 = vadd.f32 0.0, %v231
    %v233 = vpop.f32.mrf.mxu0
    %234 = vdwg.mxu0
    %v235 = vsel %vm72, %v232, -1e+30
    %v236 = vsel %vm160, %v235, -inf
    %237 = vmax.xlane.f32.xlu0 %v236
    %v238 = vpop.xlane.xlu0 %237
    %v239 = vsub.f32 %v235, %v238
    %v240 = vmul.f32 %v239, 1.442695
    %v241 = vpow.pop %v240
    %v242 = vsel %vm160, %v241, 0.0
    %243 = vadd.xlane.f32.xlu0 %v242
    %v244 = vpop.xlane.xlu0 %243
    %v245 = vrcp.pop %v244
    %v246 = vmul.f32 %v241, %v245
    %247 = vrot.lane.b32.xlu0 %v149, 64
    %v248 = vpop.permute.xlu0 %247
    %v251 = vsel %vm160, %v246, 0
    %253 = vmatprep.subr.mxu0 0.0
    %254 = vmatpush1.msra.mxu0 0.0
    %255 = vmatprep.subr.mxu0 0.0
    %256 = vmatpush1.msra.mxu0 0.0
    %257 = vmatprep.subr.mxu0 0.0
    %258 = vmatpush1.msra.mxu0 0.0
    %259 = vmatprep.subr.mxu0 0.0
    %260 = vmatpush1.msra.mxu0 0.0
    %261 = vmatprep.subr.mxu0 0.0
    %262 = vmatpush1.msra.mxu0 0.0
    %263 = vmatprep.subr.mxu0 0.0
    %264 = vmatpush1.msra.mxu0 0.0
    %265 = vmatprep.subr.mxu0 0.0
    %266 = vmatpush1.msra.mxu0 0.0
    %267 = vmatprep.subr.mxu0 0.0
    %268 = vmatpush1.msra.mxu0 0.0
    %269 = vmatprep.subr.mxu0 0.0
    %270 = vmatpush1.msra.mxu0 0.0
    %271 = vmatprep.subr.mxu0 0.0
    %272 = vmatpush1.msra.mxu0 0.0
    %273 = vmatprep.subr.mxu0 0.0
    %274 = vmatpush1.msra.mxu0 0.0
    %275 = vmatprep.subr.mxu0 0.0
    %276 = vmatpush1.msra.mxu0 0.0
    %277 = vmatprep.subr.mxu0 0.0
    %278 = vmatpush1.msra.mxu0 0.0
    %279 = vmatprep.subr.mxu0 0.0
    %280 = vmatpush1.msra.mxu0 0.0
    %281 = vmatprep.subr.mxu0 0.0
    %282 = vmatpush1.msra.mxu0 0.0
    %283 = vmatprep.subr.mxu0 0.0
    %284 = vmatpush1.msra.mxu0 %v248
    %285 = vmatprep.subr.mxu0 0.0
    %286 = vmatpush2.msra.mxu0 0.0
    %287 = vmatprep.subr.mxu0 0.0
    %288 = vmatpush2.msra.mxu0 0.0
    %289 = vmatprep.subr.mxu0 0.0
    %290 = vmatpush2.msra.mxu0 0.0
    %291 = vmatprep.subr.mxu0 0.0
    %292 = vmatpush2.msra.mxu0 0.0
    %293 = vmatprep.subr.mxu0 0.0
    %294 = vmatpush2.msra.mxu0 0.0
    %295 = vmatprep.subr.mxu0 0.0
    %296 = vmatpush2.msra.mxu0 0.0
    %297 = vmatprep.subr.mxu0 0.0
    %298 = vmatpush2.msra.mxu0 0.0
    %299 = vmatprep.subr.mxu0 0.0
    %300 = vmatpush2.msra.mxu0 0.0
    %301 = vmatprep.subr.mxu0 0.0
    %302 = vmatpush2.msra.mxu0 0.0
    %303 = vmatprep.subr.mxu0 0.0
    %304 = vmatpush2.msra.mxu0 0.0
    %305 = vmatprep.subr.mxu0 0.0
    %306 = vmatpush2.msra.mxu0 0.0
    %307 = vmatprep.subr.mxu0 0.0
    %308 = vmatpush2.msra.mxu0 0.0
    %309 = vmatprep.subr.mxu0 0.0
    %310 = vmatpush2.msra.mxu0 0.0
    %311 = vmatprep.subr.mxu0 0.0
    %312 = vmatpush2.msra.mxu0 0.0
    %313 = vmatprep.subr.mxu0 0.0
    %314 = vmatpush2.msra.mxu0 0.0
    %315 = vmatprep.subr.mxu0 0.0
    %316 = vmatpush2.msra.mxu0 0.0
    %317 = vmatprep.mubr.f32.mxu0 0.0
    %318 = vmatmul.mubr.f32.gmra.mxu0 %v251
    %v319 = vpop.f32.mrf.mxu0
    %v320 = vadd.f32 0.0, %v319
    %v321 = vpop.f32.mrf.mxu0
    %322 = vdwg.mxu0
    %323 = vrot.lane.b32.xlu0 %v149, 120
    %v324 = vpop.permute.xlu0 %323
    %325 = vrot.lane.b32.xlu0 %v149, 88
    %v326 = vpop.permute.xlu0 %325
    %v327 = vsel %vm160, %v324, 0
    %v329 = vsel %vm160, %v326, 0
    %331 = vmatprep.subr.mxu0 0.0
    %332 = vmatpush1.xpose.msra.mxu0 0.0
    %333 = vmatprep.subr.mxu0 0.0
    %334 = vmatpush1.xpose.msra.mxu0 0.0
    %335 = vmatprep.subr.mxu0 0.0
    %336 = vmatpush1.xpose.msra.mxu0 0.0
    %337 = vmatprep.subr.mxu0 0.0
    %338 = vmatpush1.xpose.msra.mxu0 0.0
    %339 = vmatprep.subr.mxu0 0.0
    %340 = vmatpush1.xpose.msra.mxu0 0.0
    %341 = vmatprep.subr.mxu0 0.0
    %342 = vmatpush1.xpose.msra.mxu0 0.0
    %343 = vmatprep.subr.mxu0 0.0
    %344 = vmatpush1.xpose.msra.mxu0 0.0
    %345 = vmatprep.subr.mxu0 0.0
    %346 = vmatpush1.xpose.msra.mxu0 0.0
    %347 = vmatprep.subr.mxu0 0.0
    %348 = vmatpush1.xpose.msra.mxu0 0.0
    %349 = vmatprep.subr.mxu0 0.0
    %350 = vmatpush1.xpose.msra.mxu0 0.0
    %351 = vmatprep.subr.mxu0 0.0
    %352 = vmatpush1.xpose.msra.mxu0 0.0
    %353 = vmatprep.subr.mxu0 0.0
    %354 = vmatpush1.xpose.msra.mxu0 0.0
    %355 = vmatprep.subr.mxu0 0.0
    %356 = vmatpush1.xpose.msra.mxu0 0.0
    %357 = vmatprep.subr.mxu0 0.0
    %358 = vmatpush1.xpose.msra.mxu0 0.0
    %359 = vmatprep.subr.mxu0 0.0
    %360 = vmatpush1.xpose.msra.mxu0 0.0
    %361 = vmatprep.subr.mxu0 0.0
    %362 = vmatpush1.xpose.msra.mxu0 %v329
    %363 = vmatprep.subr.mxu0 0.0
    %364 = vmatpush2.xpose.msra.mxu0 0.0
    %365 = vmatprep.subr.mxu0 0.0
    %366 = vmatpush2.xpose.msra.mxu0 0.0
    %367 = vmatprep.subr.mxu0 0.0
    %368 = vmatpush2.xpose.msra.mxu0 0.0
    %369 = vmatprep.subr.mxu0 0.0
    %370 = vmatpush2.xpose.msra.mxu0 0.0
    %371 = vmatprep.subr.mxu0 0.0
    %372 = vmatpush2.xpose.msra.mxu0 0.0
    %373 = vmatprep.subr.mxu0 0.0
    %374 = vmatpush2.xpose.msra.mxu0 0.0
    %375 = vmatprep.subr.mxu0 0.0
    %376 = vmatpush2.xpose.msra.mxu0 0.0
    %377 = vmatprep.subr.mxu0 0.0
    %378 = vmatpush2.xpose.msra.mxu0 0.0
    %379 = vmatprep.subr.mxu0 0.0
    %380 = vmatpush2.xpose.msra.mxu0 0.0
    %381 = vmatprep.subr.mxu0 0.0
    %382 = vmatpush2.xpose.msra.mxu0 0.0
    %383 = vmatprep.subr.mxu0 0.0
    %384 = vmatpush2.xpose.msra.mxu0 0.0
    %385 = vmatprep.subr.mxu0 0.0
    %386 = vmatpush2.xpose.msra.mxu0 0.0
    %387 = vmatprep.subr.mxu0 0.0
    %388 = vmatpush2.xpose.msra.mxu0 0.0
    %389 = vmatprep.subr.mxu0 0.0
    %390 = vmatpush2.xpose.msra.mxu0 0.0
    %391 = vmatprep.subr.mxu0 0.0
    %392 = vmatpush2.xpose.msra.mxu0 0.0
    %393 = vmatprep.subr.mxu0 0.0
    %394 = vmatpush2.xpose.msra.mxu0 0.0
    %395 = vmatprep.mubr.f32.mxu0 0.0
    %396 = vmatmul.mubr.f32.gmra.mxu0 %v327
    %v397 = vpop.f32.mrf.mxu0
    %v398 = vadd.f32 0.0, %v397
    %v399 = vpop.f32.mrf.mxu0
    %400 = vdwg.mxu0
    %v401 = vsel %vm72, %v398, -1e+30
    %v402 = vsel %vm160, %v401, -inf
    %403 = vmax.xlane.f32.xlu0 %v402
    %v404 = vpop.xlane.xlu0 %403
    %v405 = vsub.f32 %v401, %v404
    %v406 = vmul.f32 %v405, 1.442695
    %v407 = vpow.pop %v406
    %v408 = vsel %vm160, %v407, 0.0
    %409 = vadd.xlane.f32.xlu0 %v408
    %v410 = vpop.xlane.xlu0 %409
    %v411 = vrcp.pop %v410
    %v412 = vmul.f32 %v407, %v411
    %413 = vrot.lane.b32.xlu0 %v149, 56
    %v414 = vpop.permute.xlu0 %413
    %v417 = vsel %vm160, %v412, 0
    %419 = vmatprep.subr.mxu0 0.0
    %420 = vmatpush1.msra.mxu0 0.0
    %421 = vmatprep.subr.mxu0 0.0
    %422 = vmatpush1.msra.mxu0 0.0
    %423 = vmatprep.subr.mxu0 0.0
    %424 = vmatpush1.msra.mxu0 0.0
    %425 = vmatprep.subr.mxu0 0.0
    %426 = vmatpush1.msra.mxu0 0.0
    %427 = vmatprep.subr.mxu0 0.0
    %428 = vmatpush1.msra.mxu0 0.0
    %429 = vmatprep.subr.mxu0 0.0
    %430 = vmatpush1.msra.mxu0 0.0
    %431 = vmatprep.subr.mxu0 0.0
    %432 = vmatpush1.msra.mxu0 0.0
    %433 = vmatprep.subr.mxu0 0.0
    %434 = vmatpush1.msra.mxu0 0.0
    %435 = vmatprep.subr.mxu0 0.0
    %436 = vmatpush1.msra.mxu0 0.0
    %437 = vmatprep.subr.mxu0 0.0
    %438 = vmatpush1.msra.mxu0 0.0
    %439 = vmatprep.subr.mxu0 0.0
    %440 = vmatpush1.msra.mxu0 0.0
    %441 = vmatprep.subr.mxu0 0.0
    %442 = vmatpush1.msra.mxu0 0.0
    %443 = vmatprep.subr.mxu0 0.0
    %444 = vmatpush1.msra.mxu0 0.0
    %445 = vmatprep.subr.mxu0 0.0
    %446 = vmatpush1.msra.mxu0 0.0
    %447 = vmatprep.subr.mxu0 0.0
    %448 = vmatpush1.msra.mxu0 0.0
    %449 = vmatprep.subr.mxu0 0.0
    %450 = vmatpush1.msra.mxu0 %v414
    %451 = vmatprep.subr.mxu0 0.0
    %452 = vmatpush2.msra.mxu0 0.0
    %453 = vmatprep.subr.mxu0 0.0
    %454 = vmatpush2.msra.mxu0 0.0
    %455 = vmatprep.subr.mxu0 0.0
    %456 = vmatpush2.msra.mxu0 0.0
    %457 = vmatprep.subr.mxu0 0.0
    %458 = vmatpush2.msra.mxu0 0.0
    %459 = vmatprep.subr.mxu0 0.0
    %460 = vmatpush2.msra.mxu0 0.0
    %461 = vmatprep.subr.mxu0 0.0
    %462 = vmatpush2.msra.mxu0 0.0
    %463 = vmatprep.subr.mxu0 0.0
    %464 = vmatpush2.msra.mxu0 0.0
    %465 = vmatprep.subr.mxu0 0.0
    %466 = vmatpush2.msra.mxu0 0.0
    %467 = vmatprep.subr.mxu0 0.0
    %468 = vmatpush2.msra.mxu0 0.0
    %469 = vmatprep.subr.mxu0 0.0
    %470 = vmatpush2.msra.mxu0 0.0
    %471 = vmatprep.subr.mxu0 0.0
    %472 = vmatpush2.msra.mxu0 0.0
    %473 = vmatprep.subr.mxu0 0.0
    %474 = vmatpush2.msra.mxu0 0.0
    %475 = vmatprep.subr.mxu0 0.0
    %476 = vmatpush2.msra.mxu0 0.0
    %477 = vmatprep.subr.mxu0 0.0
    %478 = vmatpush2.msra.mxu0 0.0
    %479 = vmatprep.subr.mxu0 0.0
    %480 = vmatpush2.msra.mxu0 0.0
    %481 = vmatprep.subr.mxu0 0.0
    %482 = vmatpush2.msra.mxu0 0.0
    %483 = vmatprep.mubr.f32.mxu0 0.0
    %484 = vmatmul.mubr.f32.gmra.mxu0 %v417
    %v485 = vpop.f32.mrf.mxu0
    %v486 = vadd.f32 0.0, %v485
    %v487 = vpop.f32.mrf.mxu0
    %488 = vdwg.mxu0
    %489 = vrot.lane.b32.xlu0 %v149, 112
    %v490 = vpop.permute.xlu0 %489
    %491 = vrot.lane.b32.xlu0 %v149, 80
    %v492 = vpop.permute.xlu0 %491
    %v493 = vsel %vm160, %v490, 0
    %v495 = vsel %vm160, %v492, 0
    %497 = vmatprep.subr.mxu0 0.0
    %498 = vmatpush1.xpose.msra.mxu0 0.0
    %499 = vmatprep.subr.mxu0 0.0
    %500 = vmatpush1.xpose.msra.mxu0 0.0
    %501 = vmatprep.subr.mxu0 0.0
    %502 = vmatpush1.xpose.msra.mxu0 0.0
    %503 = vmatprep.subr.mxu0 0.0
    %504 = vmatpush1.xpose.msra.mxu0 0.0
    %505 = vmatprep.subr.mxu0 0.0
    %506 = vmatpush1.xpose.msra.mxu0 0.0
    %507 = vmatprep.subr.mxu0 0.0
    %508 = vmatpush1.xpose.msra.mxu0 0.0
    %509 = vmatprep.subr.mxu0 0.0
    %510 = vmatpush1.xpose.msra.mxu0 0.0
    %511 = vmatprep.subr.mxu0 0.0
    %512 = vmatpush1.xpose.msra.mxu0 0.0
    %513 = vmatprep.subr.mxu0 0.0
    %514 = vmatpush1.xpose.msra.mxu0 0.0
    %515 = vmatprep.subr.mxu0 0.0
    %516 = vmatpush1.xpose.msra.mxu0 0.0
    %517 = vmatprep.subr.mxu0 0.0
    %518 = vmatpush1.xpose.msra.mxu0 0.0
    %519 = vmatprep.subr.mxu0 0.0
    %520 = vmatpush1.xpose.msra.mxu0 0.0
    %521 = vmatprep.subr.mxu0 0.0
    %522 = vmatpush1.xpose.msra.mxu0 0.0
    %523 = vmatprep.subr.mxu0 0.0
    %524 = vmatpush1.xpose.msra.mxu0 0.0
    %525 = vmatprep.subr.mxu0 0.0
    %526 = vmatpush1.xpose.msra.mxu0 0.0
    %527 = vmatprep.subr.mxu0 0.0
    %528 = vmatpush1.xpose.msra.mxu0 %v495
    %529 = vmatprep.subr.mxu0 0.0
    %530 = vmatpush2.xpose.msra.mxu0 0.0
    %531 = vmatprep.subr.mxu0 0.0
    %532 = vmatpush2.xpose.msra.mxu0 0.0
    %533 = vmatprep.subr.mxu0 0.0
    %534 = vmatpush2.xpose.msra.mxu0 0.0
    %535 = vmatprep.subr.mxu0 0.0
    %536 = vmatpush2.xpose.msra.mxu0 0.0
    %537 = vmatprep.subr.mxu0 0.0
    %538 = vmatpush2.xpose.msra.mxu0 0.0
    %539 = vmatprep.subr.mxu0 0.0
    %540 = vmatpush2.xpose.msra.mxu0 0.0
    %541 = vmatprep.subr.mxu0 0.0
    %542 = vmatpush2.xpose.msra.mxu0 0.0
    %543 = vmatprep.subr.mxu0 0.0
    %544 = vmatpush2.xpose.msra.mxu0 0.0
    %545 = vmatprep.subr.mxu0 0.0
    %546 = vmatpush2.xpose.msra.mxu0 0.0
    %547 = vmatprep.subr.mxu0 0.0
    %548 = vmatpush2.xpose.msra.mxu0 0.0
    %549 = vmatprep.subr.mxu0 0.0
    %550 = vmatpush2.xpose.msra.mxu0 0.0
    %551 = vmatprep.subr.mxu0 0.0
    %552 = vmatpush2.xpose.msra.mxu0 0.0
    %553 = vmatprep.subr.mxu0 0.0
    %554 = vmatpush2.xpose.msra.mxu0 0.0
    %555 = vmatprep.subr.mxu0 0.0
    %556 = vmatpush2.xpose.msra.mxu0 0.0
    %557 = vmatprep.subr.mxu0 0.0
    %558 = vmatpush2.xpose.msra.mxu0 0.0
    %559 = vmatprep.subr.mxu0 0.0
    %560 = vmatpush2.xpose.msra.mxu0 0.0
    %561 = vmatprep.mubr.f32.mxu0 0.0
    %562 = vmatmul.mubr.f32.gmra.mxu0 %v493
    %v563 = vpop.f32.mrf.mxu0
    %v564 = vadd.f32 0.0, %v563
    %v565 = vpop.f32.mrf.mxu0
    %566 = vdwg.mxu0
    %v567 = vsel %vm72, %v564, -1e+30
    %v568 = vsel %vm160, %v567, -inf
    %569 = vmax.xlane.f32.xlu0 %v568
    %v570 = vpop.xlane.xlu0 %569
    %v571 = vsub.f32 %v567, %v570
    %v572 = vmul.f32 %v571, 1.442695
    %v573 = vpow.pop %v572
    %v574 = vsel %vm160, %v573, 0.0
    %575 = vadd.xlane.f32.xlu0 %v574
    %v576 = vpop.xlane.xlu0 %575
    %v577 = vrcp.pop %v576
    %v578 = vmul.f32 %v573, %v577
    %579 = vrot.lane.b32.xlu0 %v149, 48
    %v580 = vpop.permute.xlu0 %579
    %v583 = vsel %vm160, %v578, 0
    %585 = vmatprep.subr.mxu0 0.0
    %586 = vmatpush1.msra.mxu0 0.0
    %587 = vmatprep.subr.mxu0 0.0
    %588 = vmatpush1.msra.mxu0 0.0
    %589 = vmatprep.subr.mxu0 0.0
    %590 = vmatpush1.msra.mxu0 0.0
    %591 = vmatprep.subr.mxu0 0.0
    %592 = vmatpush1.msra.mxu0 0.0
    %593 = vmatprep.subr.mxu0 0.0
    %594 = vmatpush1.msra.mxu0 0.0
    %595 = vmatprep.subr.mxu0 0.0
    %596 = vmatpush1.msra.mxu0 0.0
    %597 = vmatprep.subr.mxu0 0.0
    %598 = vmatpush1.msra.mxu0 0.0
    %599 = vmatprep.subr.mxu0 0.0
    %600 = vmatpush1.msra.mxu0 0.0
    %601 = vmatprep.subr.mxu0 0.0
    %602 = vmatpush1.msra.mxu0 0.0
    %603 = vmatprep.subr.mxu0 0.0
    %604 = vmatpush1.msra.mxu0 0.0
    %605 = vmatprep.subr.mxu0 0.0
    %606 = vmatpush1.msra.mxu0 0.0
    %607 = vmatprep.subr.mxu0 0.0
    %608 = vmatpush1.msra.mxu0 0.0
    %609 = vmatprep.subr.mxu0 0.0
    %610 = vmatpush1.msra.mxu0 0.0
    %611 = vmatprep.subr.mxu0 0.0
    %612 = vmatpush1.msra.mxu0 0.0
    %613 = vmatprep.subr.mxu0 0.0
    %614 = vmatpush1.msra.mxu0 0.0
    %615 = vmatprep.subr.mxu0 0.0
    %616 = vmatpush1.msra.mxu0 %v580
    %617 = vmatprep.subr.mxu0 0.0
    %618 = vmatpush2.msra.mxu0 0.0
    %619 = vmatprep.subr.mxu0 0.0
    %620 = vmatpush2.msra.mxu0 0.0
    %621 = vmatprep.subr.mxu0 0.0
    %622 = vmatpush2.msra.mxu0 0.0
    %623 = vmatprep.subr.mxu0 0.0
    %624 = vmatpush2.msra.mxu0 0.0
    %625 = vmatprep.subr.mxu0 0.0
    %626 = vmatpush2.msra.mxu0 0.0
    %627 = vmatprep.subr.mxu0 0.0
    %628 = vmatpush2.msra.mxu0 0.0
    %629 = vmatprep.subr.mxu0 0.0
    %630 = vmatpush2.msra.mxu0 0.0
    %631 = vmatprep.subr.mxu0 0.0
    %632 = vmatpush2.msra.mxu0 0.0
    %633 = vmatprep.subr.mxu0 0.0
    %634 = vmatpush2.msra.mxu0 0.0
    %635 = vmatprep.subr.mxu0 0.0
    %636 = vmatpush2.msra.mxu0 0.0
    %637 = vmatprep.subr.mxu0 0.0
    %638 = vmatpush2.msra.mxu0 0.0
    %639 = vmatprep.subr.mxu0 0.0
    %640 = vmatpush2.msra.mxu0 0.0
    %641 = vmatprep.subr.mxu0 0.0
    %642 = vmatpush2.msra.mxu0 0.0
    %643 = vmatprep.subr.mxu0 0.0
    %644 = vmatpush2.msra.mxu0 0.0
    %645 = vmatprep.subr.mxu0 0.0
    %646 = vmatpush2.msra.mxu0 0.0
    %647 = vmatprep.subr.mxu0 0.0
    %648 = vmatpush2.msra.mxu0 0.0
    %649 = vmatprep.mubr.f32.mxu0 0.0
    %650 = vmatmul.mubr.f32.gmra.mxu0 %v583
    %v651 = vpop.f32.mrf.mxu0
    %v652 = vadd.f32 0.0, %v651
    %v653 = vpop.f32.mrf.mxu0
    %654 = vdwg.mxu0
    %655 = vrot.lane.b32.xlu0 %v149, 104
    %v656 = vpop.permute.xlu0 %655
    %657 = vrot.lane.b32.xlu0 %v149, 72
    %v658 = vpop.permute.xlu0 %657
    %v659 = vsel %vm160, %v656, 0
    %v661 = vsel %vm160, %v658, 0
    %663 = vmatprep.subr.mxu0 0.0
    %664 = vmatpush1.xpose.msra.mxu0 0.0
    %665 = vmatprep.subr.mxu0 0.0
    %666 = vmatpush1.xpose.msra.mxu0 0.0
    %667 = vmatprep.subr.mxu0 0.0
    %668 = vmatpush1.xpose.msra.mxu0 0.0
    %669 = vmatprep.subr.mxu0 0.0
    %670 = vmatpush1.xpose.msra.mxu0 0.0
    %671 = vmatprep.subr.mxu0 0.0
    %672 = vmatpush1.xpose.msra.mxu0 0.0
    %673 = vmatprep.subr.mxu0 0.0
    %674 = vmatpush1.xpose.msra.mxu0 0.0
    %675 = vmatprep.subr.mxu0 0.0
    %676 = vmatpush1.xpose.msra.mxu0 0.0
    %677 = vmatprep.subr.mxu0 0.0
    %678 = vmatpush1.xpose.msra.mxu0 0.0
    %679 = vmatprep.subr.mxu0 0.0
    %680 = vmatpush1.xpose.msra.mxu0 0.0
    %681 = vmatprep.subr.mxu0 0.0
    %682 = vmatpush1.xpose.msra.mxu0 0.0
    %683 = vmatprep.subr.mxu0 0.0
    %684 = vmatpush1.xpose.msra.mxu0 0.0
    %685 = vmatprep.subr.mxu0 0.0
    %686 = vmatpush1.xpose.msra.mxu0 0.0
    %687 = vmatprep.subr.mxu0 0.0
    %688 = vmatpush1.xpose.msra.mxu0 0.0
    %689 = vmatprep.subr.mxu0 0.0
    %690 = vmatpush1.xpose.msra.mxu0 0.0
    %691 = vmatprep.subr.mxu0 0.0
    %692 = vmatpush1.xpose.msra.mxu0 0.0
    %693 = vmatprep.subr.mxu0 0.0
    %694 = vmatpush1.xpose.msra.mxu0 %v661
    %695 = vmatprep.subr.mxu0 0.0
    %696 = vmatpush2.xpose.msra.mxu0 0.0
    %697 = vmatprep.subr.mxu0 0.0
    %698 = vmatpush2.xpose.msra.mxu0 0.0
    %699 = vmatprep.subr.mxu0 0.0
    %700 = vmatpush2.xpose.msra.mxu0 0.0
    %701 = vmatprep.subr.mxu0 0.0
    %702 = vmatpush2.xpose.msra.mxu0 0.0
    %703 = vmatprep.subr.mxu0 0.0
    %704 = vmatpush2.xpose.msra.mxu0 0.0
    %705 = vmatprep.subr.mxu0 0.0
    %706 = vmatpush2.xpose.msra.mxu0 0.0
    %707 = vmatprep.subr.mxu0 0.0
    %708 = vmatpush2.xpose.msra.mxu0 0.0
    %709 = vmatprep.subr.mxu0 0.0
    %710 = vmatpush2.xpose.msra.mxu0 0.0
    %711 = vmatprep.subr.mxu0 0.0
    %712 = vmatpush2.xpose.msra.mxu0 0.0
    %713 = vmatprep.subr.mxu0 0.0
    %714 = vmatpush2.xpose.msra.mxu0 0.0
    %715 = vmatprep.subr.mxu0 0.0
    %716 = vmatpush2.xpose.msra.mxu0 0.0
    %717 = vmatprep.subr.mxu0 0.0
    %718 = vmatpush2.xpose.msra.mxu0 0.0
    %719 = vmatprep.subr.mxu0 0.0
    %720 = vmatpush2.xpose.msra.mxu0 0.0
    %721 = vmatprep.subr.mxu0 0.0
    %722 = vmatpush2.xpose.msra.mxu0 0.0
    %723 = vmatprep.subr.mxu0 0.0
    %724 = vmatpush2.xpose.msra.mxu0 0.0
    %725 = vmatprep.subr.mxu0 0.0
    %726 = vmatpush2.xpose.msra.mxu0 0.0
    %727 = vmatprep.mubr.f32.mxu0 0.0
    %728 = vmatmul.mubr.f32.gmra.mxu0 %v659
    %v729 = vpop.f32.mrf.mxu0
    %v730 = vadd.f32 0.0, %v729
    %v731 = vpop.f32.mrf.mxu0
    %732 = vdwg.mxu0
    %v733 = vsel %vm72, %v730, -1e+30
    %v734 = vsel %vm160, %v733, -inf
    %735 = vmax.xlane.f32.xlu0 %v734
    %v736 = vpop.xlane.xlu0 %735
    %v737 = vsub.f32 %v733, %v736
    %v738 = vmul.f32 %v737, 1.442695
    %v739 = vpow.pop %v738
    %v740 = vsel %vm160, %v739, 0.0
    %741 = vadd.xlane.f32.xlu0 %v740
    %v742 = vpop.xlane.xlu0 %741
    %v743 = vrcp.pop %v742
    %v744 = vmul.f32 %v739, %v743
    %745 = vrot.lane.b32.xlu0 %v149, 40
    %v746 = vpop.permute.xlu0 %745
    %v749 = vsel %vm160, %v744, 0
    %751 = vmatprep.subr.mxu0 0.0
    %752 = vmatpush1.msra.mxu0 0.0
    %753 = vmatprep.subr.mxu0 0.0
    %754 = vmatpush1.msra.mxu0 0.0
    %755 = vmatprep.subr.mxu0 0.0
    %756 = vmatpush1.msra.mxu0 0.0
    %757 = vmatprep.subr.mxu0 0.0
    %758 = vmatpush1.msra.mxu0 0.0
    %759 = vmatprep.subr.mxu0 0.0
    %760 = vmatpush1.msra.mxu0 0.0
    %761 = vmatprep.subr.mxu0 0.0
    %762 = vmatpush1.msra.mxu0 0.0
    %763 = vmatprep.subr.mxu0 0.0
    %764 = vmatpush1.msra.mxu0 0.0
    %765 = vmatprep.subr.mxu0 0.0
    %766 = vmatpush1.msra.mxu0 0.0
    %767 = vmatprep.subr.mxu0 0.0
    %768 = vmatpush1.msra.mxu0 0.0
    %769 = vmatprep.subr.mxu0 0.0
    %770 = vmatpush1.msra.mxu0 0.0
    %771 = vmatprep.subr.mxu0 0.0
    %772 = vmatpush1.msra.mxu0 0.0
    %773 = vmatprep.subr.mxu0 0.0
    %774 = vmatpush1.msra.mxu0 0.0
    %775 = vmatprep.subr.mxu0 0.0
    %776 = vmatpush1.msra.mxu0 0.0
    %777 = vmatprep.subr.mxu0 0.0
    %778 = vmatpush1.msra.mxu0 0.0
    %779 = vmatprep.subr.mxu0 0.0
    %780 = vmatpush1.msra.mxu0 0.0
    %781 = vmatprep.subr.mxu0 0.0
    %782 = vmatpush1.msra.mxu0 %v746
    %783 = vmatprep.subr.mxu0 0.0
    %784 = vmatpush2.msra.mxu0 0.0
    %785 = vmatprep.subr.mxu0 0.0
    %786 = vmatpush2.msra.mxu0 0.0
    %787 = vmatprep.subr.mxu0 0.0
    %788 = vmatpush2.msra.mxu0 0.0
    %789 = vmatprep.subr.mxu0 0.0
    %790 = vmatpush2.msra.mxu0 0.0
    %791 = vmatprep.subr.mxu0 0.0
    %792 = vmatpush2.msra.mxu0 0.0
    %793 = vmatprep.subr.mxu0 0.0
    %794 = vmatpush2.msra.mxu0 0.0
    %795 = vmatprep.subr.mxu0 0.0
    %796 = vmatpush2.msra.mxu0 0.0
    %797 = vmatprep.subr.mxu0 0.0
    %798 = vmatpush2.msra.mxu0 0.0
    %799 = vmatprep.subr.mxu0 0.0
    %800 = vmatpush2.msra.mxu0 0.0
    %801 = vmatprep.subr.mxu0 0.0
    %802 = vmatpush2.msra.mxu0 0.0
    %803 = vmatprep.subr.mxu0 0.0
    %804 = vmatpush2.msra.mxu0 0.0
    %805 = vmatprep.subr.mxu0 0.0
    %806 = vmatpush2.msra.mxu0 0.0
    %807 = vmatprep.subr.mxu0 0.0
    %808 = vmatpush2.msra.mxu0 0.0
    %809 = vmatprep.subr.mxu0 0.0
    %810 = vmatpush2.msra.mxu0 0.0
    %811 = vmatprep.subr.mxu0 0.0
    %812 = vmatpush2.msra.mxu0 0.0
    %813 = vmatprep.subr.mxu0 0.0
    %814 = vmatpush2.msra.mxu0 0.0
    %815 = vmatprep.mubr.f32.mxu0 0.0
    %816 = vmatmul.mubr.f32.gmra.mxu0 %v749
    %v817 = vpop.f32.mrf.mxu0
    %v818 = vadd.f32 0.0, %v817
    %v819 = vpop.f32.mrf.mxu0
    %820 = vdwg.mxu0
    %822 = vrot.lane.b32.xlu0 %v486, 8
    %v823 = vpop.permute.xlu0 %822
    %826 = vrot.lane.b32.xlu0 %v652, 16
    %v827 = vpop.permute.xlu0 %826
    %830 = vrot.lane.b32.xlu0 %v818, 24
    %v831 = vpop.permute.xlu0 %830
    %v833 = vsel %vm160, %v320, %v823
    %vm834 = vcmask 130048
    %v835 = vsel %vm834, %v833, %v827
    %vm836 = vcmask 195584
    %v837 = vsel %vm836, %v835, %v831
    %839 = vrot.lane.b32.xlu0 %v154, 96
    %v840 = vpop.permute.xlu0 %839
    %v841 = vsel %vm160, %v154, 0
    %v843 = vsel %vm160, %v840, 0
    %845 = vmatprep.subr.mxu0 0.0
    %846 = vmatpush1.xpose.msra.mxu0 0.0
    %847 = vmatprep.subr.mxu0 0.0
    %848 = vmatpush1.xpose.msra.mxu0 0.0
    %849 = vmatprep.subr.mxu0 0.0
    %850 = vmatpush1.xpose.msra.mxu0 0.0
    %851 = vmatprep.subr.mxu0 0.0
    %852 = vmatpush1.xpose.msra.mxu0 0.0
    %853 = vmatprep.subr.mxu0 0.0
    %854 = vmatpush1.xpose.msra.mxu0 0.0
    %855 = vmatprep.subr.mxu0 0.0
    %856 = vmatpush1.xpose.msra.mxu0 0.0
    %857 = vmatprep.subr.mxu0 0.0
    %858 = vmatpush1.xpose.msra.mxu0 0.0
    %859 = vmatprep.subr.mxu0 0.0
    %860 = vmatpush1.xpose.msra.mxu0 0.0
    %861 = vmatprep.subr.mxu0 0.0
    %862 = vmatpush1.xpose.msra.mxu0 0.0
    %863 = vmatprep.subr.mxu0 0.0
    %864 = vmatpush1.xpose.msra.mxu0 0.0
    %865 = vmatprep.subr.mxu0 0.0
    %866 = vmatpush1.xpose.msra.mxu0 0.0
    %867 = vmatprep.subr.mxu0 0.0
    %868 = vmatpush1.xpose.msra.mxu0 0.0
    %869 = vmatprep.subr.mxu0 0.0
    %870 = vmatpush1.xpose.msra.mxu0 0.0
    %871 = vmatprep.subr.mxu0 0.0
    %872 = vmatpush1.xpose.msra.mxu0 0.0
    %873 = vmatprep.subr.mxu0 0.0
    %874 = vmatpush1.xpose.msra.mxu0 0.0
    %875 = vmatprep.subr.mxu0 0.0
    %876 = vmatpush1.xpose.msra.mxu0 %v843
    %877 = vmatprep.subr.mxu0 0.0
    %878 = vmatpush2.xpose.msra.mxu0 0.0
    %879 = vmatprep.subr.mxu0 0.0
    %880 = vmatpush2.xpose.msra.mxu0 0.0
    %881 = vmatprep.subr.mxu0 0.0
    %882 = vmatpush2.xpose.msra.mxu0 0.0
    %883 = vmatprep.subr.mxu0 0.0
    %884 = vmatpush2.xpose.msra.mxu0 0.0
    %885 = vmatprep.subr.mxu0 0.0
    %886 = vmatpush2.xpose.msra.mxu0 0.0
    %887 = vmatprep.subr.mxu0 0.0
    %888 = vmatpush2.xpose.msra.mxu0 0.0
    %889 = vmatprep.subr.mxu0 0.0
    %890 = vmatpush2.xpose.msra.mxu0 0.0
    %891 = vmatprep.subr.mxu0 0.0
    %892 = vmatpush2.xpose.msra.mxu0 0.0
    %893 = vmatprep.subr.mxu0 0.0
    %894 = vmatpush2.xpose.msra.mxu0 0.0
    %895 = vmatprep.subr.mxu0 0.0
    %896 = vmatpush2.xpose.msra.mxu0 0.0
    %897 = vmatprep.subr.mxu0 0.0
    %898 = vmatpush2.xpose.msra.mxu0 0.0
    %899 = vmatprep.subr.mxu0 0.0
    %900 = vmatpush2.xpose.msra.mxu0 0.0
    %901 = vmatprep.subr.mxu0 0.0
    %902 = vmatpush2.xpose.msra.mxu0 0.0
    %903 = vmatprep.subr.mxu0 0.0
    %904 = vmatpush2.xpose.msra.mxu0 0.0
    %905 = vmatprep.subr.mxu0 0.0
    %906 = vmatpush2.xpose.msra.mxu0 0.0
    %907 = vmatprep.subr.mxu0 0.0
    %908 = vmatpush2.xpose.msra.mxu0 0.0
    %909 = vmatprep.mubr.f32.mxu0 0.0
    %910 = vmatmul.mubr.f32.gmra.mxu0 %v841
    %v911 = vpop.f32.mrf.mxu0
    %v912 = vadd.f32 0.0, %v911
    %v913 = vpop.f32.mrf.mxu0
    %914 = vdwg.mxu0
    %v915 = vsel %vm72, %v912, -1e+30
    %v916 = vsel %vm160, %v915, -inf
    %917 = vmax.xlane.f32.xlu0 %v916
    %v918 = vpop.xlane.xlu0 %917
    %v919 = vsub.f32 %v915, %v918
    %v920 = vmul.f32 %v919, 1.442695
    %v921 = vpow.pop %v920
    %v922 = vsel %vm160, %v921, 0.0
    %923 = vadd.xlane.f32.xlu0 %v922
    %v924 = vpop.xlane.xlu0 %923
    %v925 = vrcp.pop %v924
    %v926 = vmul.f32 %v921, %v925
    %927 = vrot.lane.b32.xlu0 %v154, 64
    %v928 = vpop.permute.xlu0 %927
    %v931 = vsel %vm160, %v926, 0
    %933 = vmatprep.subr.mxu0 0.0
    %934 = vmatpush1.msra.mxu0 0.0
    %935 = vmatprep.subr.mxu0 0.0
    %936 = vmatpush1.msra.mxu0 0.0
    %937 = vmatprep.subr.mxu0 0.0
    %938 = vmatpush1.msra.mxu0 0.0
    %939 = vmatprep.subr.mxu0 0.0
    %940 = vmatpush1.msra.mxu0 0.0
    %941 = vmatprep.subr.mxu0 0.0
    %942 = vmatpush1.msra.mxu0 0.0
    %943 = vmatprep.subr.mxu0 0.0
    %944 = vmatpush1.msra.mxu0 0.0
    %945 = vmatprep.subr.mxu0 0.0
    %946 = vmatpush1.msra.mxu0 0.0
    %947 = vmatprep.subr.mxu0 0.0
    %948 = vmatpush1.msra.mxu0 0.0
    %949 = vmatprep.subr.mxu0 0.0
    %950 = vmatpush1.msra.mxu0 0.0
    %951 = vmatprep.subr.mxu0 0.0
    %952 = vmatpush1.msra.mxu0 0.0
    %953 = vmatprep.subr.mxu0 0.0
    %954 = vmatpush1.msra.mxu0 0.0
    %955 = vmatprep.subr.mxu0 0.0
    %956 = vmatpush1.msra.mxu0 0.0
    %957 = vmatprep.subr.mxu0 0.0
    %958 = vmatpush1.msra.mxu0 0.0
    %959 = vmatprep.subr.mxu0 0.0
    %960 = vmatpush1.msra.mxu0 0.0
    %961 = vmatprep.subr.mxu0 0.0
    %962 = vmatpush1.msra.mxu0 0.0
    %963 = vmatprep.subr.mxu0 0.0
    %964 = vmatpush1.msra.mxu0 %v928
    %965 = vmatprep.subr.mxu0 0.0
    %966 = vmatpush2.msra.mxu0 0.0
    %967 = vmatprep.subr.mxu0 0.0
    %968 = vmatpush2.msra.mxu0 0.0
    %969 = vmatprep.subr.mxu0 0.0
    %970 = vmatpush2.msra.mxu0 0.0
    %971 = vmatprep.subr.mxu0 0.0
    %972 = vmatpush2.msra.mxu0 0.0
    %973 = vmatprep.subr.mxu0 0.0
    %974 = vmatpush2.msra.mxu0 0.0
    %975 = vmatprep.subr.mxu0 0.0
    %976 = vmatpush2.msra.mxu0 0.0
    %977 = vmatprep.subr.mxu0 0.0
    %978 = vmatpush2.msra.mxu0 0.0
    %979 = vmatprep.subr.mxu0 0.0
    %980 = vmatpush2.msra.mxu0 0.0
    %981 = vmatprep.subr.mxu0 0.0
    %982 = vmatpush2.msra.mxu0 0.0
    %983 = vmatprep.subr.mxu0 0.0
    %984 = vmatpush2.msra.mxu0 0.0
    %985 = vmatprep.subr.mxu0 0.0
    %986 = vmatpush2.msra.mxu0 0.0
    %987 = vmatprep.subr.mxu0 0.0
    %988 = vmatpush2.msra.mxu0 0.0
    %989 = vmatprep.subr.mxu0 0.0
    %990 = vmatpush2.msra.mxu0 0.0
    %991 = vmatprep.subr.mxu0 0.0
    %992 = vmatpush2.msra.mxu0 0.0
    %993 = vmatprep.subr.mxu0 0.0
    %994 = vmatpush2.msra.mxu0 0.0
    %995 = vmatprep.subr.mxu0 0.0
    %996 = vmatpush2.msra.mxu0 0.0
    %997 = vmatprep.mubr.f32.mxu0 0.0
    %998 = vmatmul.mubr.f32.gmra.mxu0 %v931
    %v999 = vpop.f32.mrf.mxu0
    %v1000 = vadd.f32 0.0, %v999
    %v1001 = vpop.f32.mrf.mxu0
    %1002 = vdwg.mxu0
    %1003 = vrot.lane.b32.xlu0 %v154, 120
    %v1004 = vpop.permute.xlu0 %1003
    %1005 = vrot.lane.b32.xlu0 %v154, 88
    %v1006 = vpop.permute.xlu0 %1005
    %v1007 = vsel %vm160, %v1004, 0
    %v1009 = vsel %vm160, %v1006, 0
    %1011 = vmatprep.subr.mxu0 0.0
    %1012 = vmatpush1.xpose.msra.mxu0 0.0
    %1013 = vmatprep.subr.mxu0 0.0
    %1014 = vmatpush1.xpose.msra.mxu0 0.0
    %1015 = vmatprep.subr.mxu0 0.0
    %1016 = vmatpush1.xpose.msra.mxu0 0.0
    %1017 = vmatprep.subr.mxu0 0.0
    %1018 = vmatpush1.xpose.msra.mxu0 0.0
    %1019 = vmatprep.subr.mxu0 0.0
    %1020 = vmatpush1.xpose.msra.mxu0 0.0
    %1021 = vmatprep.subr.mxu0 0.0
    %1022 = vmatpush1.xpose.msra.mxu0 0.0
    %1023 = vmatprep.subr.mxu0 0.0
    %1024 = vmatpush1.xpose.msra.mxu0 0.0
    %1025 = vmatprep.subr.mxu0 0.0
    %1026 = vmatpush1.xpose.msra.mxu0 0.0
    %1027 = vmatprep.subr.mxu0 0.0
    %1028 = vmatpush1.xpose.msra.mxu0 0.0
    %1029 = vmatprep.subr.mxu0 0.0
    %1030 = vmatpush1.xpose.msra.mxu0 0.0
    %1031 = vmatprep.subr.mxu0 0.0
    %1032 = vmatpush1.xpose.msra.mxu0 0.0
    %1033 = vmatprep.subr.mxu0 0.0
    %1034 = vmatpush1.xpose.msra.mxu0 0.0
    %1035 = vmatprep.subr.mxu0 0.0
    %1036 = vmatpush1.xpose.msra.mxu0 0.0
    %1037 = vmatprep.subr.mxu0 0.0
    %1038 = vmatpush1.xpose.msra.mxu0 0.0
    %1039 = vmatprep.subr.mxu0 0.0
    %1040 = vmatpush1.xpose.msra.mxu0 0.0
    %1041 = vmatprep.subr.mxu0 0.0
    %1042 = vmatpush1.xpose.msra.mxu0 %v1009
    %1043 = vmatprep.subr.mxu0 0.0
    %1044 = vmatpush2.xpose.msra.mxu0 0.0
    %1045 = vmatprep.subr.mxu0 0.0
    %1046 = vmatpush2.xpose.msra.mxu0 0.0
    %1047 = vmatprep.subr.mxu0 0.0
    %1048 = vmatpush2.xpose.msra.mxu0 0.0
    %1049 = vmatprep.subr.mxu0 0.0
    %1050 = vmatpush2.xpose.msra.mxu0 0.0
    %1051 = vmatprep.subr.mxu0 0.0
    %1052 = vmatpush2.xpose.msra.mxu0 0.0
    %1053 = vmatprep.subr.mxu0 0.0
    %1054 = vmatpush2.xpose.msra.mxu0 0.0
    %1055 = vmatprep.subr.mxu0 0.0
    %1056 = vmatpush2.xpose.msra.mxu0 0.0
    %1057 = vmatprep.subr.mxu0 0.0
    %1058 = vmatpush2.xpose.msra.mxu0 0.0
    %1059 = vmatprep.subr.mxu0 0.0
    %1060 = vmatpush2.xpose.msra.mxu0 0.0
    %1061 = vmatprep.subr.mxu0 0.0
    %1062 = vmatpush2.xpose.msra.mxu0 0.0
    %1063 = vmatprep.subr.mxu0 0.0
    %1064 = vmatpush2.xpose.msra.mxu0 0.0
    %1065 = vmatprep.subr.mxu0 0.0
    %1066 = vmatpush2.xpose.msra.mxu0 0.0
    %1067 = vmatprep.subr.mxu0 0.0
    %1068 = vmatpush2.xpose.msra.mxu0 0.0
    %1069 = vmatprep.subr.mxu0 0.0
    %1070 = vmatpush2.xpose.msra.mxu0 0.0
    %1071 = vmatprep.subr.mxu0 0.0
    %1072 = vmatpush2.xpose.msra.mxu0 0.0
    %1073 = vmatprep.subr.mxu0 0.0
    %1074 = vmatpush2.xpose.msra.mxu0 0.0
    %1075 = vmatprep.mubr.f32.mxu0 0.0
    %1076 = vmatmul.mubr.f32.gmra.mxu0 %v1007
    %v1077 = vpop.f32.mrf.mxu0
    %v1078 = vadd.f32 0.0, %v1077
    %v1079 = vpop.f32.mrf.mxu0
    %1080 = vdwg.mxu0
    %v1081 = vsel %vm72, %v1078, -1e+30
    %v1082 = vsel %vm160, %v1081, -inf
    %1083 = vmax.xlane.f32.xlu0 %v1082
    %v1084 = vpop.xlane.xlu0 %1083
    %v1085 = vsub.f32 %v1081, %v1084
    %v1086 = vmul.f32 %v1085, 1.442695
    %v1087 = vpow.pop %v1086
    %v1088 = vsel %vm160, %v1087, 0.0
    %1089 = vadd.xlane.f32.xlu0 %v1088
    %v1090 = vpop.xlane.xlu0 %1089
    %v1091 = vrcp.pop %v1090
    %v1092 = vmul.f32 %v1087, %v1091
    %1093 = vrot.lane.b32.xlu0 %v154, 56
    %v1094 = vpop.permute.xlu0 %1093
    %v1097 = vsel %vm160, %v1092, 0
    %1099 = vmatprep.subr.mxu0 0.0
    %1100 = vmatpush1.msra.mxu0 0.0
    %1101 = vmatprep.subr.mxu0 0.0
    %1102 = vmatpush1.msra.mxu0 0.0
    %1103 = vmatprep.subr.mxu0 0.0
    %1104 = vmatpush1.msra.mxu0 0.0
    %1105 = vmatprep.subr.mxu0 0.0
    %1106 = vmatpush1.msra.mxu0 0.0
    %1107 = vmatprep.subr.mxu0 0.0
    %1108 = vmatpush1.msra.mxu0 0.0
    %1109 = vmatprep.subr.mxu0 0.0
    %1110 = vmatpush1.msra.mxu0 0.0
    %1111 = vmatprep.subr.mxu0 0.0
    %1112 = vmatpush1.msra.mxu0 0.0
    %1113 = vmatprep.subr.mxu0 0.0
    %1114 = vmatpush1.msra.mxu0 0.0
    %1115 = vmatprep.subr.mxu0 0.0
    %1116 = vmatpush1.msra.mxu0 0.0
    %1117 = vmatprep.subr.mxu0 0.0
    %1118 = vmatpush1.msra.mxu0 0.0
    %1119 = vmatprep.subr.mxu0 0.0
    %1120 = vmatpush1.msra.mxu0 0.0
    %1121 = vmatprep.subr.mxu0 0.0
    %1122 = vmatpush1.msra.mxu0 0.0
    %1123 = vmatprep.subr.mxu0 0.0
    %1124 = vmatpush1.msra.mxu0 0.0
    %1125 = vmatprep.subr.mxu0 0.0
    %1126 = vmatpush1.msra.mxu0 0.0
    %1127 = vmatprep.subr.mxu0 0.0
    %1128 = vmatpush1.msra.mxu0 0.0
    %1129 = vmatprep.subr.mxu0 0.0
    %1130 = vmatpush1.msra.mxu0 %v1094
    %1131 = vmatprep.subr.mxu0 0.0
    %1132 = vmatpush2.msra.mxu0 0.0
    %1133 = vmatprep.subr.mxu0 0.0
    %1134 = vmatpush2.msra.mxu0 0.0
    %1135 = vmatprep.subr.mxu0 0.0
    %1136 = vmatpush2.msra.mxu0 0.0
    %1137 = vmatprep.subr.mxu0 0.0
    %1138 = vmatpush2.msra.mxu0 0.0
    %1139 = vmatprep.subr.mxu0 0.0
    %1140 = vmatpush2.msra.mxu0 0.0
    %1141 = vmatprep.subr.mxu0 0.0
    %1142 = vmatpush2.msra.mxu0 0.0
    %1143 = vmatprep.subr.mxu0 0.0
    %1144 = vmatpush2.msra.mxu0 0.0
    %1145 = vmatprep.subr.mxu0 0.0
    %1146 = vmatpush2.msra.mxu0 0.0
    %1147 = vmatprep.subr.mxu0 0.0
    %1148 = vmatpush2.msra.mxu0 0.0
    %1149 = vmatprep.subr.mxu0 0.0
    %1150 = vmatpush2.msra.mxu0 0.0
    %1151 = vmatprep.subr.mxu0 0.0
    %1152 = vmatpush2.msra.mxu0 0.0
    %1153 = vmatprep.subr.mxu0 0.0
    %1154 = vmatpush2.msra.mxu0 0.0
    %1155 = vmatprep.subr.mxu0 0.0
    %1156 = vmatpush2.msra.mxu0 0.0
    %1157 = vmatprep.subr.mxu0 0.0
    %1158 = vmatpush2.msra.mxu0 0.0
    %1159 = vmatprep.subr.mxu0 0.0
    %1160 = vmatpush2.msra.mxu0 0.0
    %1161 = vmatprep.subr.mxu0 0.0
    %1162 = vmatpush2.msra.mxu0 0.0
    %1163 = vmatprep.mubr.f32.mxu0 0.0
    %1164 = vmatmul.mubr.f32.gmra.mxu0 %v1097
    %v1165 = vpop.f32.mrf.mxu0
    %v1166 = vadd.f32 0.0, %v1165
    %v1167 = vpop.f32.mrf.mxu0
    %1168 = vdwg.mxu0
    %1169 = vrot.lane.b32.xlu0 %v154, 112
    %v1170 = vpop.permute.xlu0 %1169
    %1171 = vrot.lane.b32.xlu0 %v154, 80
    %v1172 = vpop.permute.xlu0 %1171
    %v1173 = vsel %vm160, %v1170, 0
    %v1175 = vsel %vm160, %v1172, 0
    %1177 = vmatprep.subr.mxu0 0.0
    %1178 = vmatpush1.xpose.msra.mxu0 0.0
    %1179 = vmatprep.subr.mxu0 0.0
    %1180 = vmatpush1.xpose.msra.mxu0 0.0
    %1181 = vmatprep.subr.mxu0 0.0
    %1182 = vmatpush1.xpose.msra.mxu0 0.0
    %1183 = vmatprep.subr.mxu0 0.0
    %1184 = vmatpush1.xpose.msra.mxu0 0.0
    %1185 = vmatprep.subr.mxu0 0.0
    %1186 = vmatpush1.xpose.msra.mxu0 0.0
    %1187 = vmatprep.subr.mxu0 0.0
    %1188 = vmatpush1.xpose.msra.mxu0 0.0
    %1189 = vmatprep.subr.mxu0 0.0
    %1190 = vmatpush1.xpose.msra.mxu0 0.0
    %1191 = vmatprep.subr.mxu0 0.0
    %1192 = vmatpush1.xpose.msra.mxu0 0.0
    %1193 = vmatprep.subr.mxu0 0.0
    %1194 = vmatpush1.xpose.msra.mxu0 0.0
    %1195 = vmatprep.subr.mxu0 0.0
    %1196 = vmatpush1.xpose.msra.mxu0 0.0
    %1197 = vmatprep.subr.mxu0 0.0
    %1198 = vmatpush1.xpose.msra.mxu0 0.0
    %1199 = vmatprep.subr.mxu0 0.0
    %1200 = vmatpush1.xpose.msra.mxu0 0.0
    %1201 = vmatprep.subr.mxu0 0.0
    %1202 = vmatpush1.xpose.msra.mxu0 0.0
    %1203 = vmatprep.subr.mxu0 0.0
    %1204 = vmatpush1.xpose.msra.mxu0 0.0
    %1205 = vmatprep.subr.mxu0 0.0
    %1206 = vmatpush1.xpose.msra.mxu0 0.0
    %1207 = vmatprep.subr.mxu0 0.0
    %1208 = vmatpush1.xpose.msra.mxu0 %v1175
    %1209 = vmatprep.subr.mxu0 0.0
    %1210 = vmatpush2.xpose.msra.mxu0 0.0
    %1211 = vmatprep.subr.mxu0 0.0
    %1212 = vmatpush2.xpose.msra.mxu0 0.0
    %1213 = vmatprep.subr.mxu0 0.0
    %1214 = vmatpush2.xpose.msra.mxu0 0.0
    %1215 = vmatprep.subr.mxu0 0.0
    %1216 = vmatpush2.xpose.msra.mxu0 0.0
    %1217 = vmatprep.subr.mxu0 0.0
    %1218 = vmatpush2.xpose.msra.mxu0 0.0
    %1219 = vmatprep.subr.mxu0 0.0
    %1220 = vmatpush2.xpose.msra.mxu0 0.0
    %1221 = vmatprep.subr.mxu0 0.0
    %1222 = vmatpush2.xpose.msra.mxu0 0.0
    %1223 = vmatprep.subr.mxu0 0.0
    %1224 = vmatpush2.xpose.msra.mxu0 0.0
    %1225 = vmatprep.subr.mxu0 0.0
    %1226 = vmatpush2.xpose.msra.mxu0 0.0
    %1227 = vmatprep.subr.mxu0 0.0
    %1228 = vmatpush2.xpose.msra.mxu0 0.0
    %1229 = vmatprep.subr.mxu0 0.0
    %1230 = vmatpush2.xpose.msra.mxu0 0.0
    %1231 = vmatprep.subr.mxu0 0.0
    %1232 = vmatpush2.xpose.msra.mxu0 0.0
    %1233 = vmatprep.subr.mxu0 0.0
    %1234 = vmatpush2.xpose.msra.mxu0 0.0
    %1235 = vmatprep.subr.mxu0 0.0
    %1236 = vmatpush2.xpose.msra.mxu0 0.0
    %1237 = vmatprep.subr.mxu0 0.0
    %1238 = vmatpush2.xpose.msra.mxu0 0.0
    %1239 = vmatprep.subr.mxu0 0.0
    %1240 = vmatpush2.xpose.msra.mxu0 0.0
    %1241 = vmatprep.mubr.f32.mxu0 0.0
    %1242 = vmatmul.mubr.f32.gmra.mxu0 %v1173
    %v1243 = vpop.f32.mrf.mxu0
    %v1244 = vadd.f32 0.0, %v1243
    %v1245 = vpop.f32.mrf.mxu0
    %1246 = vdwg.mxu0
    %v1247 = vsel %vm72, %v1244, -1e+30
    %v1248 = vsel %vm160, %v1247, -inf
    %1249 = vmax.xlane.f32.xlu0 %v1248
    %v1250 = vpop.xlane.xlu0 %1249
    %v1251 = vsub.f32 %v1247, %v1250
    %v1252 = vmul.f32 %v1251, 1.442695
    %v1253 = vpow.pop %v1252
    %v1254 = vsel %vm160, %v1253, 0.0
    %1255 = vadd.xlane.f32.xlu0 %v1254
    %v1256 = vpop.xlane.xlu0 %1255
    %v1257 = vrcp.pop %v1256
    %v1258 = vmul.f32 %v1253, %v1257
    %1259 = vrot.lane.b32.xlu0 %v154, 48
    %v1260 = vpop.permute.xlu0 %1259
    %v1263 = vsel %vm160, %v1258, 0
    %1265 = vmatprep.subr.mxu0 0.0
    %1266 = vmatpush1.msra.mxu0 0.0
    %1267 = vmatprep.subr.mxu0 0.0
    %1268 = vmatpush1.msra.mxu0 0.0
    %1269 = vmatprep.subr.mxu0 0.0
    %1270 = vmatpush1.msra.mxu0 0.0
    %1271 = vmatprep.subr.mxu0 0.0
    %1272 = vmatpush1.msra.mxu0 0.0
    %1273 = vmatprep.subr.mxu0 0.0
    %1274 = vmatpush1.msra.mxu0 0.0
    %1275 = vmatprep.subr.mxu0 0.0
    %1276 = vmatpush1.msra.mxu0 0.0
    %1277 = vmatprep.subr.mxu0 0.0
    %1278 = vmatpush1.msra.mxu0 0.0
    %1279 = vmatprep.subr.mxu0 0.0
    %1280 = vmatpush1.msra.mxu0 0.0
    %1281 = vmatprep.subr.mxu0 0.0
    %1282 = vmatpush1.msra.mxu0 0.0
    %1283 = vmatprep.subr.mxu0 0.0
    %1284 = vmatpush1.msra.mxu0 0.0
    %1285 = vmatprep.subr.mxu0 0.0
    %1286 = vmatpush1.msra.mxu0 0.0
    %1287 = vmatprep.subr.mxu0 0.0
    %1288 = vmatpush1.msra.mxu0 0.0
    %1289 = vmatprep.subr.mxu0 0.0
    %1290 = vmatpush1.msra.mxu0 0.0
    %1291 = vmatprep.subr.mxu0 0.0
    %1292 = vmatpush1.msra.mxu0 0.0
    %1293 = vmatprep.subr.mxu0 0.0
    %1294 = vmatpush1.msra.mxu0 0.0
    %1295 = vmatprep.subr.mxu0 0.0
    %1296 = vmatpush1.msra.mxu0 %v1260
    %1297 = vmatprep.subr.mxu0 0.0
    %1298 = vmatpush2.msra.mxu0 0.0
    %1299 = vmatprep.subr.mxu0 0.0
    %1300 = vmatpush2.msra.mxu0 0.0
    %1301 = vmatprep.subr.mxu0 0.0
    %1302 = vmatpush2.msra.mxu0 0.0
    %1303 = vmatprep.subr.mxu0 0.0
    %1304 = vmatpush2.msra.mxu0 0.0
    %1305 = vmatprep.subr.mxu0 0.0
    %1306 = vmatpush2.msra.mxu0 0.0
    %1307 = vmatprep.subr.mxu0 0.0
    %1308 = vmatpush2.msra.mxu0 0.0
    %1309 = vmatprep.subr.mxu0 0.0
    %1310 = vmatpush2.msra.mxu0 0.0
    %1311 = vmatprep.subr.mxu0 0.0
    %1312 = vmatpush2.msra.mxu0 0.0
    %1313 = vmatprep.subr.mxu0 0.0
    %1314 = vmatpush2.msra.mxu0 0.0
    %1315 = vmatprep.subr.mxu0 0.0
    %1316 = vmatpush2.msra.mxu0 0.0
    %1317 = vmatprep.subr.mxu0 0.0
    %1318 = vmatpush2.msra.mxu0 0.0
    %1319 = vmatprep.subr.mxu0 0.0
    %1320 = vmatpush2.msra.mxu0 0.0
    %1321 = vmatprep.subr.mxu0 0.0
    %1322 = vmatpush2.msra.mxu0 0.0
    %1323 = vmatprep.subr.mxu0 0.0
    %1324 = vmatpush2.msra.mxu0 0.0
    %1325 = vmatprep.subr.mxu0 0.0
    %1326 = vmatpush2.msra.mxu0 0.0
    %1327 = vmatprep.subr.mxu0 0.0
    %1328 = vmatpush2.msra.mxu0 0.0
    %1329 = vmatprep.mubr.f32.mxu0 0.0
    %1330 = vmatmul.mubr.f32.gmra.mxu0 %v1263
    %v1331 = vpop.f32.mrf.mxu0
    %v1332 = vadd.f32 0.0, %v1331
    %v1333 = vpop.f32.mrf.mxu0
    %1334 = vdwg.mxu0
    %1335 = vrot.lane.b32.xlu0 %v154, 104
    %v1336 = vpop.permute.xlu0 %1335
    %1337 = vrot.lane.b32.xlu0 %v154, 72
    %v1338 = vpop.permute.xlu0 %1337
    %v1339 = vsel %vm160, %v1336, 0
    %v1341 = vsel %vm160, %v1338, 0
    %1343 = vmatprep.subr.mxu0 0.0
    %1344 = vmatpush1.xpose.msra.mxu0 0.0
    %1345 = vmatprep.subr.mxu0 0.0
    %1346 = vmatpush1.xpose.msra.mxu0 0.0
    %1347 = vmatprep.subr.mxu0 0.0
    %1348 = vmatpush1.xpose.msra.mxu0 0.0
    %1349 = vmatprep.subr.mxu0 0.0
    %1350 = vmatpush1.xpose.msra.mxu0 0.0
    %1351 = vmatprep.subr.mxu0 0.0
    %1352 = vmatpush1.xpose.msra.mxu0 0.0
    %1353 = vmatprep.subr.mxu0 0.0
    %1354 = vmatpush1.xpose.msra.mxu0 0.0
    %1355 = vmatprep.subr.mxu0 0.0
    %1356 = vmatpush1.xpose.msra.mxu0 0.0
    %1357 = vmatprep.subr.mxu0 0.0
    %1358 = vmatpush1.xpose.msra.mxu0 0.0
    %1359 = vmatprep.subr.mxu0 0.0
    %1360 = vmatpush1.xpose.msra.mxu0 0.0
    %1361 = vmatprep.subr.mxu0 0.0
    %1362 = vmatpush1.xpose.msra.mxu0 0.0
    %1363 = vmatprep.subr.mxu0 0.0
    %1364 = vmatpush1.xpose.msra.mxu0 0.0
    %1365 = vmatprep.subr.mxu0 0.0
    %1366 = vmatpush1.xpose.msra.mxu0 0.0
    %1367 = vmatprep.subr.mxu0 0.0
    %1368 = vmatpush1.xpose.msra.mxu0 0.0
    %1369 = vmatprep.subr.mxu0 0.0
    %1370 = vmatpush1.xpose.msra.mxu0 0.0
    %1371 = vmatprep.subr.mxu0 0.0
    %1372 = vmatpush1.xpose.msra.mxu0 0.0
    %1373 = vmatprep.subr.mxu0 0.0
    %1374 = vmatpush1.xpose.msra.mxu0 %v1341
    %1375 = vmatprep.subr.mxu0 0.0
    %1376 = vmatpush2.xpose.msra.mxu0 0.0
    %1377 = vmatprep.subr.mxu0 0.0
    %1378 = vmatpush2.xpose.msra.mxu0 0.0
    %1379 = vmatprep.subr.mxu0 0.0
    %1380 = vmatpush2.xpose.msra.mxu0 0.0
    %1381 = vmatprep.subr.mxu0 0.0
    %1382 = vmatpush2.xpose.msra.mxu0 0.0
    %1383 = vmatprep.subr.mxu0 0.0
    %1384 = vmatpush2.xpose.msra.mxu0 0.0
    %1385 = vmatprep.subr.mxu0 0.0
    %1386 = vmatpush2.xpose.msra.mxu0 0.0
    %1387 = vmatprep.subr.mxu0 0.0
    %1388 = vmatpush2.xpose.msra.mxu0 0.0
    %1389 = vmatprep.subr.mxu0 0.0
    %1390 = vmatpush2.xpose.msra.mxu0 0.0
    %1391 = vmatprep.subr.mxu0 0.0
    %1392 = vmatpush2.xpose.msra.mxu0 0.0
    %1393 = vmatprep.subr.mxu0 0.0
    %1394 = vmatpush2.xpose.msra.mxu0 0.0
    %1395 = vmatprep.subr.mxu0 0.0
    %1396 = vmatpush2.xpose.msra.mxu0 0.0
    %1397 = vmatprep.subr.mxu0 0.0
    %1398 = vmatpush2.xpose.msra.mxu0 0.0
    %1399 = vmatprep.subr.mxu0 0.0
    %1400 = vmatpush2.xpose.msra.mxu0 0.0
    %1401 = vmatprep.subr.mxu0 0.0
    %1402 = vmatpush2.xpose.msra.mxu0 0.0
    %1403 = vmatprep.subr.mxu0 0.0
    %1404 = vmatpush2.xpose.msra.mxu0 0.0
    %1405 = vmatprep.subr.mxu0 0.0
    %1406 = vmatpush2.xpose.msra.mxu0 0.0
    %1407 = vmatprep.mubr.f32.mxu0 0.0
    %1408 = vmatmul.mubr.f32.gmra.mxu0 %v1339
    %v1409 = vpop.f32.mrf.mxu0
    %v1410 = vadd.f32 0.0, %v1409
    %v1411 = vpop.f32.mrf.mxu0
    %1412 = vdwg.mxu0
    %v1413 = vsel %vm72, %v1410, -1e+30
    %v1414 = vsel %vm160, %v1413, -inf
    %1415 = vmax.xlane.f32.xlu0 %v1414
    %v1416 = vpop.xlane.xlu0 %1415
    %v1417 = vsub.f32 %v1413, %v1416
    %v1418 = vmul.f32 %v1417, 1.442695
    %v1419 = vpow.pop %v1418
    %v1420 = vsel %vm160, %v1419, 0.0
    %1421 = vadd.xlane.f32.xlu0 %v1420
    %v1422 = vpop.xlane.xlu0 %1421
    %v1423 = vrcp.pop %v1422
    %v1424 = vmul.f32 %v1419, %v1423
    %1425 = vrot.lane.b32.xlu0 %v154, 40
    %v1426 = vpop.permute.xlu0 %1425
    %v1429 = vsel %vm160, %v1424, 0
    %1431 = vmatprep.subr.mxu0 0.0
    %1432 = vmatpush1.msra.mxu0 0.0
    %1433 = vmatprep.subr.mxu0 0.0
    %1434 = vmatpush1.msra.mxu0 0.0
    %1435 = vmatprep.subr.mxu0 0.0
    %1436 = vmatpush1.msra.mxu0 0.0
    %1437 = vmatprep.subr.mxu0 0.0
    %1438 = vmatpush1.msra.mxu0 0.0
    %1439 = vmatprep.subr.mxu0 0.0
    %1440 = vmatpush1.msra.mxu0 0.0
    %1441 = vmatprep.subr.mxu0 0.0
    %1442 = vmatpush1.msra.mxu0 0.0
    %1443 = vmatprep.subr.mxu0 0.0
    %1444 = vmatpush1.msra.mxu0 0.0
    %1445 = vmatprep.subr.mxu0 0.0
    %1446 = vmatpush1.msra.mxu0 0.0
    %1447 = vmatprep.subr.mxu0 0.0
    %1448 = vmatpush1.msra.mxu0 0.0
    %1449 = vmatprep.subr.mxu0 0.0
    %1450 = vmatpush1.msra.mxu0 0.0
    %1451 = vmatprep.subr.mxu0 0.0
    %1452 = vmatpush1.msra.mxu0 0.0
    %1453 = vmatprep.subr.mxu0 0.0
    %1454 = vmatpush1.msra.mxu0 0.0
    %1455 = vmatprep.subr.mxu0 0.0
    %1456 = vmatpush1.msra.mxu0 0.0
    %1457 = vmatprep.subr.mxu0 0.0
    %1458 = vmatpush1.msra.mxu0 0.0
    %1459 = vmatprep.subr.mxu0 0.0
    %1460 = vmatpush1.msra.mxu0 0.0
    %1461 = vmatprep.subr.mxu0 0.0
    %1462 = vmatpush1.msra.mxu0 %v1426
    %1463 = vmatprep.subr.mxu0 0.0
    %1464 = vmatpush2.msra.mxu0 0.0
    %1465 = vmatprep.subr.mxu0 0.0
    %1466 = vmatpush2.msra.mxu0 0.0
    %1467 = vmatprep.subr.mxu0 0.0
    %1468 = vmatpush2.msra.mxu0 0.0
    %1469 = vmatprep.subr.mxu0 0.0
    %1470 = vmatpush2.msra.mxu0 0.0
    %1471 = vmatprep.subr.mxu0 0.0
    %1472 = vmatpush2.msra.mxu0 0.0
    %1473 = vmatprep.subr.mxu0 0.0
    %1474 = vmatpush2.msra.mxu0 0.0
    %1475 = vmatprep.subr.mxu0 0.0
    %1476 = vmatpush2.msra.mxu0 0.0
    %1477 = vmatprep.subr.mxu0 0.0
    %1478 = vmatpush2.msra.mxu0 0.0
    %1479 = vmatprep.subr.mxu0 0.0
    %1480 = vmatpush2.msra.mxu0 0.0
    %1481 = vmatprep.subr.mxu0 0.0
    %1482 = vmatpush2.msra.mxu0 0.0
    %1483 = vmatprep.subr.mxu0 0.0
    %1484 = vmatpush2.msra.mxu0 0.0
    %1485 = vmatprep.subr.mxu0 0.0
    %1486 = vmatpush2.msra.mxu0 0.0
    %1487 = vmatprep.subr.mxu0 0.0
    %1488 = vmatpush2.msra.mxu0 0.0
    %1489 = vmatprep.subr.mxu0 0.0
    %1490 = vmatpush2.msra.mxu0 0.0
    %1491 = vmatprep.subr.mxu0 0.0
    %1492 = vmatpush2.msra.mxu0 0.0
    %1493 = vmatprep.subr.mxu0 0.0
    %1494 = vmatpush2.msra.mxu0 0.0
    %1495 = vmatprep.mubr.f32.mxu0 0.0
    %1496 = vmatmul.mubr.f32.gmra.mxu0 %v1429
    %v1497 = vpop.f32.mrf.mxu0
    %v1498 = vadd.f32 0.0, %v1497
    %v1499 = vpop.f32.mrf.mxu0
    %1500 = vdwg.mxu0
    %1502 = vrot.lane.b32.xlu0 %v1166, 8
    %v1503 = vpop.permute.xlu0 %1502
    %1506 = vrot.lane.b32.xlu0 %v1332, 16
    %v1507 = vpop.permute.xlu0 %1506
    %1510 = vrot.lane.b32.xlu0 %v1498, 24
    %v1511 = vpop.permute.xlu0 %1510
    %v1513 = vsel %vm160, %v1000, %v1503
    %v1514 = vsel %vm834, %v1513, %v1507
    %v1515 = vsel %vm836, %v1514, %v1511
    %v1517 = vlaneseq
    %v1518 = vshrl.u32 %v1517, 7
    %v1519 = vsub.s32 0, %v1518
    %v1520 = vrot.slane %v67, %v1519
    %v1523 = vsel %vm75, %v837, 0
    %v1526 = vsel %vm75, %v1515, 0
    %1528 = vmatprep.subr.mxu0 0.0
    %1529 = vmatpush1.msra.mxu0 0.0
    %1530 = vmatprep.subr.mxu0 0.0
    %1531 = vmatpush1.msra.mxu0 0.0
    %1532 = vmatprep.subr.mxu0 0.0
    %1533 = vmatpush1.msra.mxu0 0.0
    %1534 = vmatprep.subr.mxu0 0.0
    %1535 = vmatpush1.msra.mxu0 0.0
    %1536 = vmatprep.subr.mxu0 0.0
    %1537 = vmatpush1.msra.mxu0 0.0
    %1538 = vmatprep.subr.mxu0 0.0
    %1539 = vmatpush1.msra.mxu0 0.0
    %1540 = vmatprep.subr.mxu0 0.0
    %1541 = vmatpush1.msra.mxu0 0.0
    %1542 = vmatprep.subr.mxu0 0.0
    %1543 = vmatpush1.msra.mxu0 0.0
    %1544 = vmatprep.subr.mxu0 0.0
    %1545 = vmatpush1.msra.mxu0 0.0
    %1546 = vmatprep.subr.mxu0 0.0
    %1547 = vmatpush1.msra.mxu0 0.0
    %1548 = vmatprep.subr.mxu0 0.0
    %1549 = vmatpush1.msra.mxu0 0.0
    %1550 = vmatprep.subr.mxu0 0.0
    %1551 = vmatpush1.msra.mxu0 0.0
    %1552 = vmatprep.subr.mxu0 0.0
    %1553 = vmatpush1.msra.mxu0 %v66
    %1554 = vmatprep.subr.mxu0 0.0
    %1555 = vmatpush1.msra.mxu0 %v65
    %1556 = vmatprep.subr.mxu0 0.0
    %1557 = vmatpush1.msra.mxu0 %v64
    %1558 = vmatprep.subr.mxu0 0.0
    %1559 = vmatpush1.msra.mxu0 %v63
    %1560 = vmatprep.subr.mxu0 0.0
    %1561 = vmatpush2.msra.mxu0 0.0
    %1562 = vmatprep.subr.mxu0 0.0
    %1563 = vmatpush2.msra.mxu0 0.0
    %1564 = vmatprep.subr.mxu0 0.0
    %1565 = vmatpush2.msra.mxu0 0.0
    %1566 = vmatprep.subr.mxu0 0.0
    %1567 = vmatpush2.msra.mxu0 0.0
    %1568 = vmatprep.subr.mxu0 0.0
    %1569 = vmatpush2.msra.mxu0 0.0
    %1570 = vmatprep.subr.mxu0 0.0
    %1571 = vmatpush2.msra.mxu0 0.0
    %1572 = vmatprep.subr.mxu0 0.0
    %1573 = vmatpush2.msra.mxu0 0.0
    %1574 = vmatprep.subr.mxu0 0.0
    %1575 = vmatpush2.msra.mxu0 0.0
    %1576 = vmatprep.subr.mxu0 0.0
    %1577 = vmatpush2.msra.mxu0 0.0
    %1578 = vmatprep.subr.mxu0 0.0
    %1579 = vmatpush2.msra.mxu0 0.0
    %1580 = vmatprep.subr.mxu0 0.0
    %1581 = vmatpush2.msra.mxu0 0.0
    %1582 = vmatprep.subr.mxu0 0.0
    %1583 = vmatpush2.msra.mxu0 0.0
    %1584 = vmatprep.subr.mxu0 0.0
    %1585 = vmatpush2.msra.mxu0 0.0
    %1586 = vmatprep.subr.mxu0 0.0
    %1587 = vmatpush2.msra.mxu0 0.0
    %1588 = vmatprep.subr.mxu0 0.0
    %1589 = vmatpush2.msra.mxu0 0.0
    %1590 = vmatprep.subr.mxu0 0.0
    %1591 = vmatpush2.msra.mxu0 0.0
    %1592 = vmatprep.mubr.f32.mxu0 0.0
    %1593 = vmatmul.mubr.f32.gmra.mxu0 %v1523
    %v1594 = vpop.f32.mrf.mxu0
    %v1595 = vadd.f32 %v1520, %v1594
    %v1596 = vpop.f32.mrf.mxu0
    %1597 = vmatprep.mubr.f32.mxu0 0.0
    %1598 = vmatmul.mubr.f32.gmra.mxu0 %v1526
    %v1599 = vpop.f32.mrf.mxu0
    %v1600 = vadd.f32 %v1520, %v1599
    %v1601 = vpop.f32.mrf.mxu0
    %1602 = vdwg.mxu0
    %1603 = vst.msk [vmem:[#allocation8] sm:$0xff] %vm75, %v1595
    %1604 = vst.msk [vmem:[#allocation8 + $0x8] sm:$0xff] %vm75, %v1600
    // Predicated region
    $region30: #{tpu_custom_call.1} parent=1 // pred_check
      _
    $region31: #{tpu_custom_call.1} parent=1 // pred_check_branch
      %1606 = sbr.rel (0) target = $region33
    $region32: #{tpu_custom_call.1} parent=1 // pred_region
      %s1608 = ssub.s32 256, 256
      %1609 = vsyncadd [#allocation4], %s1608
      %s1610 = sshll.u32 [#allocation8], 4
      %s1611 = int_to_ptr.vmem [resolvable:$true] %s1610
      %1616 = dma.vmem_to_hbm [thread:$0]  %s1611, 256, %s4, [#allocation4], 128, 128, 8
    $region33: #{tpu_custom_call.1} parent=1 // pred_fallthru
      _
    // Predicated region
    $region34: #{tpu_custom_call.1} parent=1 // pred_check
      _
    $region35: #{tpu_custom_call.1} parent=1 // pred_check_branch
      %1618 = sbr.rel (0) target = $region37
    $region36: #{tpu_custom_call.1} parent=1 // pred_region
      %1619 = dma.done [#allocation4], 256
    $region37: #{tpu_custom_call.1} parent=1 // pred_fallthru
      _
    %1620 = vsyncpa [#allocation3], 1
    %1621 = vsyncpa [#allocation6], 1
    %1622 = vsyncpa [#allocation4], 1

</llo_original>
